<compile_context>
chip_gen: v7x
topology: tpu7x:2x2x1
jax: 0.10.0
libtpu: 0.0.40
codegen_flags: <defaults>
</compile_context>

<pallas_src>
import functools

import jax
import jax.numpy as jnp
from jax import lax
from jax.experimental import pallas as pl
from jax.experimental.pallas import tpu as pltpu

_BN_EPS = 1e-5


def _gau_kernel(tb, mxu_bf16, approx_recip, defer_norm,
                zf_ref, xf_ref,
                wq_ref, bq_ref,
                ws_ref, bs_ref,
                wg_ref, bg_ref,
                wfie_ref, wfix_ref, bfi_ref,
                out_ref):
    """zf_ref: (tb, C, Nz)   xf_ref: (tb, C, Nx)
    w*_ref : (Cout, Cin)     b*_ref: (Cout, 1)
    out_ref: (tb, outC, Nx)
    """
    f32 = jnp.float32

    def mm(a, b):
        if mxu_bf16:
            a = a.astype(jnp.bfloat16)
            b = b.astype(jnp.bfloat16)
        return jnp.dot(a, b, preferred_element_type=f32)

    def mm_c0(a, b):  # contract axis 0 of both operands -> (a1, b1)
        if mxu_bf16:
            a = a.astype(jnp.bfloat16)
            b = b.astype(jnp.bfloat16)
        return lax.dot_general(a, b, (((0,), (0,)), ((), ())),
                               preferred_element_type=f32)

    # Weights / biases: loaded once per grid step, shared across the batch block.
    wq = wq_ref[...]
    bq = bq_ref[...]
    ws = ws_ref[...]
    bs = bs_ref[...]
    wg = wg_ref[...]
    bg = bg_ref[...]
    wfie = wfie_ref[...]
    wfix = wfix_ref[...]
    bfi = bfi_ref[...]

    def body(b, carry):
        zf = zf_ref[b]           # (C, Nz)   dynamic first-axis index
        xf = xf_ref[b]           # (C, Nx)

        # 1x1 convs: (Cout, Cin) @ (Cin, N) -> (Cout, N); spatial stays on lanes.
        xf_t = mm(wq, xf) + bq                       # query(xf)
        zf_t = mm(ws, zf) + bs                       # support(zf)
        xf_g = jnp.maximum(mm(wg, xf) + bg, 0.0)     # g(xf) (BN folded)
        zf_g = jnp.maximum(mm(wg, zf) + bg, 0.0)     # g(zf) (BN folded)

        # similarity^T: contract channels -> (Nz, Nx); softmax over zf axis (0).
        simT = mm_c0(zf_t, xf_t)
        simT = simT - jnp.max(simT, axis=0, keepdims=True)
        p = jnp.exp(simT)
        denom = jnp.sum(p, axis=0, keepdims=True)            # (1, Nx)
        if approx_recip:
            inv = pl.reciprocal(denom, approx=True)           # EUP slot, not VPU divide
        else:
            inv = 1.0 / denom

        if defer_norm:
            # Normalize after the fi matmul: (outC, Nx) scale instead of (Nz, Nx).
            emb = mm(zf_g, p)                                 # un-normalized embedding
            out = mm(wfie, emb) * inv + mm(wfix, xf_g) + bfi  # (outC, Nx)
        else:
            p = p * inv
            emb = mm(zf_g, p)                                 # (C, Nx)
            out = mm(wfie, emb) + mm(wfix, xf_g) + bfi        # (outC, Nx)

        out_ref[b] = jnp.maximum(out, 0.0).astype(out_ref.dtype)
        return carry

    # fori_loop (not a static Python unroll) bounds live intermediates to one
    # batch; unroll=True keeps LLO scheduler visibility for short trip counts.
    lax.fori_loop(0, tb, body, None, unroll=True)


def graph_attention_union(zf_nchw, xf_nchw, params, *,
                          batch_block=1, mxu_bf16=True,
                          approx_recip=True, out_dtype=jnp.float32):
    """zf_nchw: (B, C, Hz, Wz), xf_nchw: (B, C, Hx, Wx) -> (B, outC, Hx, Wx)."""
    B, C, Hz, Wz = zf_nchw.shape
    Bx, Cx, Hx, Wx = xf_nchw.shape
    assert (B, C) == (Bx, Cx)
    Nz, Nx = Hz * Wz, Hx * Wx
    outC = params["w_fi"].shape[0]
    tb = batch_block
    assert B % tb == 0, "batch_block must divide the batch size"
    # NOTE: keep B // tb >= 2 on v7x (batch grid is the only "parallel" axis).

    # NCHW -> (B, C, N): pure reshape, no transpose / HBM round trip.
    zf = zf_nchw.reshape(B, C, Nz)
    xf = xf_nchw.reshape(B, C, Nx)

    # Weights stay in PyTorch (Cout, Cin) layout; split w_fi at trace time.
    wq, ws, wg = params["w_q"], params["w_s"], params["w_g"]
    wfie, wfix = params["w_fi"][:, :C], params["w_fi"][:, C:]
    bq = params["b_q"][:, None]        # (C, 1): lane-broadcast bias
    bs = params["b_s"][:, None]
    bg = params["b_g"][:, None]
    bfi = params["b_fi"][:, None]      # (outC, 1)

    if mxu_bf16:
        bf16 = jnp.bfloat16
        zf, xf = zf.astype(bf16), xf.astype(bf16)
        wq, ws, wg, wfie, wfix = (w.astype(bf16)
                                  for w in (wq, ws, wg, wfie, wfix))

    # Defer softmax normalization past the fi matmul only when it saves VPU
    # multiplies (Nz > outC); production C=outC=256 keeps the original order.
    defer_norm = Nz > outC

    # ---- VMEM budget (generation aware, ~1.5x slack, no tb on intermediates).
    in_itemsize = 2 if mxu_bf16 else 4
    out_itemsize = jnp.dtype(out_dtype).itemsize
    act_bytes = tb * C * (Nz + Nx) * in_itemsize
    w_bytes = (3 * C * C + 2 * outC * C) * in_itemsize + (3 * C + outC) * 4
    out_bytes = tb * outC * Nx * out_itemsize
    # Live intermediates for ONE batch (fori_loop bounds the live set).
    inter_bytes = (2 * Nz * Nx + 4 * C * Nx + 2 * C * Nz + 2 * outC * Nx) * 4
    need = 2 * (act_bytes + out_bytes) + 2 * w_bytes + inter_bytes
    try:
        phys = getattr(pltpu.get_tpu_info(), "vmem_capacity_bytes", 64 << 20)
    except Exception:
        phys = 64 << 20
    cap = min(96 << 20, (3 * phys) // 4)   # ~48 MiB on v7x, up to 96 MiB v5e/v6e
    vmem_limit = int(min(cap, max(8 << 20, int(1.5 * need))))

    # ---- Cost estimate (lets XLA schedule surrounding ops around the call).
    flops = B * (2 * C * C * (2 * Nx + 2 * Nz)     # four 1x1 convs
                 + 4 * C * Nz * Nx                 # similarity + embedding
                 + 4 * C * outC * Nx)              # fi (2C -> outC)
    transcendentals = B * (Nz * Nx + Nx)           # exp + reciprocal
    bytes_accessed = (B * C * (Nz + Nx) * in_itemsize
                      + w_bytes + B * outC * Nx * out_itemsize)
    cost = pl.CostEstimate(flops=int(flops),
                           transcendentals=int(transcendentals),
                           bytes_accessed=int(bytes_accessed))

    kernel = functools.partial(_gau_kernel, tb, mxu_bf16, approx_recip, defer_norm)

    def build(weight_pipeline_mode):
        def wspec(shape):
            ndim = len(shape)
            idx = lambda b, _n=ndim: (0,) * _n
            if weight_pipeline_mode is None:
                return pl.BlockSpec(shape, idx)
            return pl.BlockSpec(shape, idx, pipeline_mode=weight_pipeline_mode)

        return pl.pallas_call(
            kernel,
            out_shape=jax.ShapeDtypeStruct((B, outC, Nx), out_dtype),
            grid_spec=pltpu.PrefetchScalarGridSpec(
                num_scalar_prefetch=0,
                grid=(B // tb,),
                in_specs=[
                    pl.BlockSpec((tb, C, Nz), lambda b: (b, 0, 0)),
                    pl.BlockSpec((tb, C, Nx), lambda b: (b, 0, 0)),
                    wspec((C, C)), wspec((C, 1)),            # query
                    wspec((C, C)), wspec((C, 1)),            # support
                    wspec((C, C)), wspec((C, 1)),            # g (BN folded)
                    wspec((outC, C)), wspec((outC, C)),      # fi split halves
                    wspec((outC, 1)),                        # fi bias (BN folded)
                ],
                out_specs=pl.BlockSpec((tb, outC, Nx), lambda b: (b, 0, 0)),
            ),
            compiler_params=pltpu.CompilerParams(
                dimension_semantics=("parallel",),
                vmem_limit_bytes=vmem_limit),
            cost_estimate=cost,
        )

    args = (zf, xf, wq, bq, ws, bs, wg, bg, wfie, wfix, bfi)
    try:
        # Constant-index weights only need a single VMEM buffer each.
        out = build(pl.Buffered(1))(*args)
    except Exception:
        # Fallback if this Pallas version rejects single-buffered pipeline_mode
        # (costs one extra VMEM copy of the weights, nothing else).
        out = build(None)(*args)

    # (B, outC, Nx) -> NCHW is a pure reshape (stores were already lane-dense).
    return out.reshape(B, outC, Hx, Wx)


def init_params(key, in_channel, out_channel):
    """Deterministic synthetic weights; BN folded into conv (inference mode)."""
    C, outC = in_channel, out_channel
    ks = jax.random.split(key, 16)

    def conv(kw, kb, cin, cout, scale=0.2):
        w = scale * jax.random.normal(kw, (cout, cin), jnp.float32)
        b = scale * jax.random.normal(kb, (cout,), jnp.float32)
        return w, b

    def bn(kg, kb, c):
        gamma = 1.0 + 0.1 * jax.random.normal(kg, (c,), jnp.float32)
        beta = 0.1 * jax.random.normal(kb, (c,), jnp.float32)
        mean = jnp.zeros((c,), jnp.float32)
        var = jnp.ones((c,), jnp.float32)
        return gamma, beta, mean, var

    def fold(w, b, gamma, beta, mean, var):
        scale = gamma / jnp.sqrt(var + _BN_EPS)
        return w * scale[:, None], (b - mean) * scale + beta

    w_q, b_q = conv(ks[0], ks[1], C, C)
    w_s, b_s = conv(ks[2], ks[3], C, C)

    w_g, b_g = conv(ks[4], ks[5], C, C)
    w_g, b_g = fold(w_g, b_g, *bn(ks[6], ks[7], C))

    w_fi, b_fi = conv(ks[8], ks[9], 2 * C, outC)
    w_fi, b_fi = fold(w_fi, b_fi, *bn(ks[10], ks[11], outC))

    return dict(w_q=w_q, b_q=b_q, w_s=w_s, b_s=b_s,
                w_g=w_g, b_g=b_g, w_fi=w_fi, b_fi=b_fi)


def reference(zf, xf, params):
    """Pure-JAX reference mirroring the PyTorch forward (NCHW)."""
    def conv1x1(x, w, b):
        return jnp.einsum("bchw,oc->bohw", x, w) + b[None, :, None, None]

    B, C, Hx, Wx = xf.shape
    _, _, Hz, Wz = zf.shape
    Nx, Nz = Hx * Wx, Hz * Wz

    xf_trans = conv1x1(xf, params["w_q"], params["b_q"])
    zf_trans = conv1x1(zf, params["w_s"], params["b_s"])
    xf_g = jax.nn.relu(conv1x1(xf, params["w_g"], params["b_g"]))
    zf_g = jax.nn.relu(conv1x1(zf, params["w_g"], params["b_g"]))

    zf_trans_plain = zf_trans.reshape(B, C, Nz)
    zf_g_plain = zf_g.reshape(B, C, Nz).transpose(0, 2, 1)
    xf_trans_plain = xf_trans.reshape(B, C, Nx).transpose(0, 2, 1)

    similar = jnp.matmul(xf_trans_plain, zf_trans_plain)
    similar = jax.nn.softmax(similar, axis=2)
    embedding = jnp.matmul(similar, zf_g_plain).transpose(0, 2, 1)
    embedding = embedding.reshape(B, C, Hx, Wx)

    output = jnp.concatenate([embedding, xf_g], axis=1)
    output = jax.nn.relu(conv1x1(output, params["w_fi"], params["b_fi"]))
    return output


if __name__ == "__main__":
    key = jax.random.PRNGKey(0)
    kz, kx, kp = jax.random.split(key, 3)

    in_channel, out_channel = 4, 8
    B, Hx, Wx = 4, 16, 16          # search feature (xf)
    Hz, Wz = 8, 8                  # template feature (zf)

    zf = jax.random.normal(kz, (B, in_channel, Hz, Wz), jnp.float32)
    xf = jax.random.normal(kx, (B, in_channel, Hx, Wx), jnp.float32)
    params = init_params(kp, in_channel, out_channel)

    ref = reference(zf, xf, params)

    # Default path: bf16 MXU operands + approx softmax reciprocal, one batch
    # per grid step (4 "parallel" steps -> both v7x TensorCores stay busy).
    out1 = jax.block_until_ready(graph_attention_union(zf, xf, params))
    assert out1.shape == (B, out_channel, Hx, Wx)
    assert jnp.allclose(out1, ref, atol=5e-2, rtol=5e-2), "mismatch (bf16 default)"

    # Exact f32 path, two batches per grid step: exercises the fori_loop tb>1
    # path without collapsing the batch grid (still 2 grid steps).
    out2 = jax.block_until_ready(graph_attention_union(
        zf, xf, params, batch_block=2, mxu_bf16=False, approx_recip=False))
    assert jnp.allclose(out2, ref, atol=1e-4, rtol=1e-4), "mismatch (f32 exact)"

    print("KERNEL_OK")
</pallas_src>

<mosaic_0001>
module attributes {stable_mosaic.version = 11 : i64} {
  func.func @_gau_kernel(%arg0: i32, %arg1: memref<1x4x64xbf16, #tpu.memory_space<vmem>>, %arg2: memref<1x4x256xbf16, #tpu.memory_space<vmem>>, %arg3: memref<4x4xbf16, #tpu.memory_space<vmem>>, %arg4: memref<4x1xf32, #tpu.memory_space<vmem>>, %arg5: memref<4x4xbf16, #tpu.memory_space<vmem>>, %arg6: memref<4x1xf32, #tpu.memory_space<vmem>>, %arg7: memref<4x4xbf16, #tpu.memory_space<vmem>>, %arg8: memref<4x1xf32, #tpu.memory_space<vmem>>, %arg9: memref<8x4xbf16, #tpu.memory_space<vmem>>, %arg10: memref<8x4xbf16, #tpu.memory_space<vmem>>, %arg11: memref<8x1xf32, #tpu.memory_space<vmem>>, %arg12: memref<1x8x256xf32, #tpu.memory_space<vmem>>) attributes {dimension_semantics = [#tpu.dimension_semantics<parallel>], iteration_bounds = array<i64: 4>, scalar_prefetch = 0 : i64, scratch_operands = 0 : i64, tpu.core_type = #tpu.core_type<tc>, window_params = [{transform_indices = @transform_0, window_bounds = array<i64: 1, 4, 64>}, {transform_indices = @transform_1, window_bounds = array<i64: 1, 4, 256>}, {pipeline_mode = #tpu.pipeline_mode<synchronous>, transform_indices = @transform_2, window_bounds = array<i64: 4, 4>}, {pipeline_mode = #tpu.pipeline_mode<synchronous>, transform_indices = @transform_3, window_bounds = array<i64: 4, 1>}, {pipeline_mode = #tpu.pipeline_mode<synchronous>, transform_indices = @transform_4, window_bounds = array<i64: 4, 4>}, {pipeline_mode = #tpu.pipeline_mode<synchronous>, transform_indices = @transform_5, window_bounds = array<i64: 4, 1>}, {pipeline_mode = #tpu.pipeline_mode<synchronous>, transform_indices = @transform_6, window_bounds = array<i64: 4, 4>}, {pipeline_mode = #tpu.pipeline_mode<synchronous>, transform_indices = @transform_7, window_bounds = array<i64: 4, 1>}, {pipeline_mode = #tpu.pipeline_mode<synchronous>, transform_indices = @transform_8, window_bounds = array<i64: 8, 4>}, {pipeline_mode = #tpu.pipeline_mode<synchronous>, transform_indices = @transform_9, window_bounds = array<i64: 8, 4>}, {pipeline_mode = #tpu.pipeline_mode<synchronous>, transform_indices = @transform_10, window_bounds = array<i64: 8, 1>}, {transform_indices = @transform_11, window_bounds = array<i64: 1, 8, 256>}]} {
    %c0 = arith.constant 0 : index
    %c0_0 = arith.constant 0 : index
    %0 = vector.load %arg3[%c0, %c0_0] : memref<4x4xbf16, #tpu.memory_space<vmem>>, vector<4x4xbf16>
    %c0_1 = arith.constant 0 : index
    %c0_2 = arith.constant 0 : index
    %1 = vector.load %arg4[%c0_1, %c0_2] : memref<4x1xf32, #tpu.memory_space<vmem>>, vector<4x1xf32>
    %c0_3 = arith.constant 0 : index
    %c0_4 = arith.constant 0 : index
    %2 = vector.load %arg5[%c0_3, %c0_4] : memref<4x4xbf16, #tpu.memory_space<vmem>>, vector<4x4xbf16>
    %c0_5 = arith.constant 0 : index
    %c0_6 = arith.constant 0 : index
    %3 = vector.load %arg6[%c0_5, %c0_6] : memref<4x1xf32, #tpu.memory_space<vmem>>, vector<4x1xf32>
    %c0_7 = arith.constant 0 : index
    %c0_8 = arith.constant 0 : index
    %4 = vector.load %arg7[%c0_7, %c0_8] : memref<4x4xbf16, #tpu.memory_space<vmem>>, vector<4x4xbf16>
    %c0_9 = arith.constant 0 : index
    %c0_10 = arith.constant 0 : index
    %5 = vector.load %arg8[%c0_9, %c0_10] : memref<4x1xf32, #tpu.memory_space<vmem>>, vector<4x1xf32>
    %c0_11 = arith.constant 0 : index
    %c0_12 = arith.constant 0 : index
    %6 = vector.load %arg9[%c0_11, %c0_12] : memref<8x4xbf16, #tpu.memory_space<vmem>>, vector<8x4xbf16>
    %c0_13 = arith.constant 0 : index
    %c0_14 = arith.constant 0 : index
    %7 = vector.load %arg10[%c0_13, %c0_14] : memref<8x4xbf16, #tpu.memory_space<vmem>>, vector<8x4xbf16>
    %c0_15 = arith.constant 0 : index
    %c0_16 = arith.constant 0 : index
    %8 = vector.load %arg11[%c0_15, %c0_16] : memref<8x1xf32, #tpu.memory_space<vmem>>, vector<8x1xf32>
    %c0_i32 = arith.constant 0 : i32
    %9 = arith.index_cast %c0_i32 : i32 to index
    %c0_17 = arith.constant 0 : index
    %c0_18 = arith.constant 0 : index
    %10 = vector.load %arg1[%9, %c0_17, %c0_18] : memref<1x4x64xbf16, #tpu.memory_space<vmem>>, vector<1x4x64xbf16>
    %11 = vector.shape_cast %10 : vector<1x4x64xbf16> to vector<4x64xbf16>
    %12 = arith.index_cast %c0_i32 : i32 to index
    %c0_19 = arith.constant 0 : index
    %c0_20 = arith.constant 0 : index
    %13 = vector.load %arg2[%12, %c0_19, %c0_20] : memref<1x4x256xbf16, #tpu.memory_space<vmem>>, vector<1x4x256xbf16>
    %14 = vector.shape_cast %13 : vector<1x4x256xbf16> to vector<4x256xbf16>
    %cst = arith.constant dense<0.000000e+00> : vector<4x256xf32>
    %15 = tpu.matmul %0, %14, %cst {dimension_numbers = #tpu.dot_dimension_numbers<[1], [0], [0], [1], [0, 0, 1, 1], [], []>} : vector<4x4xbf16>, vector<4x256xbf16>, vector<4x256xf32> -> vector<4x256xf32>
    %16 = vector.broadcast %1 : vector<4x1xf32> to vector<4x256xf32>
    %17 = arith.addf %15, %16 : vector<4x256xf32>
    %cst_21 = arith.constant dense<0.000000e+00> : vector<4x64xf32>
    %18 = tpu.matmul %2, %11, %cst_21 {dimension_numbers = #tpu.dot_dimension_numbers<[1], [0], [0], [1], [0, 0, 1, 1], [], []>} : vector<4x4xbf16>, vector<4x64xbf16>, vector<4x64xf32> -> vector<4x64xf32>
    %19 = vector.broadcast %3 : vector<4x1xf32> to vector<4x64xf32>
    %20 = arith.addf %18, %19 : vector<4x64xf32>
    %cst_22 = arith.constant dense<0.000000e+00> : vector<4x256xf32>
    %21 = tpu.matmul %4, %14, %cst_22 {dimension_numbers = #tpu.dot_dimension_numbers<[1], [0], [0], [1], [0, 0, 1, 1], [], []>} : vector<4x4xbf16>, vector<4x256xbf16>, vector<4x256xf32> -> vector<4x256xf32>
    %22 = vector.broadcast %5 : vector<4x1xf32> to vector<4x256xf32>
    %23 = arith.addf %21, %22 : vector<4x256xf32>
    %cst_23 = arith.constant 0.000000e+00 : f32
    %24 = vector.broadcast %cst_23 : f32 to vector<4x256xf32>
    %25 = arith.maximumf %23, %24 : vector<4x256xf32>
    %cst_24 = arith.constant dense<0.000000e+00> : vector<4x64xf32>
    %26 = tpu.matmul %4, %11, %cst_24 {dimension_numbers = #tpu.dot_dimension_numbers<[1], [0], [0], [1], [0, 0, 1, 1], [], []>} : vector<4x4xbf16>, vector<4x64xbf16>, vector<4x64xf32> -> vector<4x64xf32>
    %27 = vector.broadcast %5 : vector<4x1xf32> to vector<4x64xf32>
    %28 = arith.addf %26, %27 : vector<4x64xf32>
    %cst_25 = arith.constant 0.000000e+00 : f32
    %29 = vector.broadcast %cst_25 : f32 to vector<4x64xf32>
    %30 = arith.maximumf %28, %29 : vector<4x64xf32>
    %31 = arith.truncf %20 : vector<4x64xf32> to vector<4x64xbf16>
    %32 = arith.truncf %17 : vector<4x256xf32> to vector<4x256xbf16>
    %cst_26 = arith.constant dense<0.000000e+00> : vector<64x256xf32>
    %33 = tpu.matmul %31, %32, %cst_26 {dimension_numbers = #tpu.dot_dimension_numbers<[0], [0], [1], [1], [0, 1, 1, 1], [], []>} : vector<4x64xbf16>, vector<4x256xbf16>, vector<64x256xf32> -> vector<64x256xf32>
    %cst_27 = arith.constant dense<0xFF800000> : vector<256xf32>
    %34 = vector.multi_reduction <maximumf>, %33, %cst_27 [0] : vector<64x256xf32> to vector<256xf32>
    %35 = vector.shape_cast %34 : vector<256xf32> to vector<1x256xf32>
    %36 = vector.broadcast %35 : vector<1x256xf32> to vector<64x256xf32>
    %37 = arith.subf %33, %36 : vector<64x256xf32>
    %38 = math.exp %37 : vector<64x256xf32>
    %cst_28 = arith.constant dense<0.000000e+00> : vector<256xf32>
    %39 = vector.multi_reduction <add>, %38, %cst_28 [0] : vector<64x256xf32> to vector<256xf32>
    %40 = vector.shape_cast %39 : vector<256xf32> to vector<1x256xf32>
    %41 = tpu.reciprocal %40 {approx = true} : vector<1x256xf32> -> vector<1x256xf32>
    %42 = arith.truncf %30 : vector<4x64xf32> to vector<4x64xbf16>
    %43 = arith.truncf %38 : vector<64x256xf32> to vector<64x256xbf16>
    %cst_29 = arith.constant dense<0.000000e+00> : vector<4x256xf32>
    %44 = tpu.matmul %42, %43, %cst_29 {dimension_numbers = #tpu.dot_dimension_numbers<[1], [0], [0], [1], [0, 0, 1, 1], [], []>} : vector<4x64xbf16>, vector<64x256xbf16>, vector<4x256xf32> -> vector<4x256xf32>
    %45 = arith.truncf %44 : vector<4x256xf32> to vector<4x256xbf16>
    %cst_30 = arith.constant dense<0.000000e+00> : vector<8x256xf32>
    %46 = tpu.matmul %6, %45, %cst_30 {dimension_numbers = #tpu.dot_dimension_numbers<[1], [0], [0], [1], [0, 0, 1, 1], [], []>} : vector<8x4xbf16>, vector<4x256xbf16>, vector<8x256xf32> -> vector<8x256xf32>
    %47 = vector.broadcast %41 : vector<1x256xf32> to vector<8x256xf32>
    %48 = arith.mulf %46, %47 : vector<8x256xf32>
    %49 = arith.truncf %25 : vector<4x256xf32> to vector<4x256xbf16>
    %cst_31 = arith.constant dense<0.000000e+00> : vector<8x256xf32>
    %50 = tpu.matmul %7, %49, %cst_31 {dimension_numbers = #tpu.dot_dimension_numbers<[1], [0], [0], [1], [0, 0, 1, 1], [], []>} : vector<8x4xbf16>, vector<4x256xbf16>, vector<8x256xf32> -> vector<8x256xf32>
    %51 = arith.addf %48, %50 : vector<8x256xf32>
    %52 = vector.broadcast %8 : vector<8x1xf32> to vector<8x256xf32>
    %53 = arith.addf %51, %52 : vector<8x256xf32>
    %cst_32 = arith.constant 0.000000e+00 : f32
    %54 = vector.broadcast %cst_32 : f32 to vector<8x256xf32>
    %55 = arith.maximumf %53, %54 : vector<8x256xf32>
    %56 = arith.index_cast %c0_i32 : i32 to index
    %c0_33 = arith.constant 0 : index
    %c0_34 = arith.constant 0 : index
    %57 = vector.load %arg12[%56, %c0_33, %c0_34] : memref<1x8x256xf32, #tpu.memory_space<vmem>>, vector<1x8x256xf32>
    %58 = vector.shape_cast %57 : vector<1x8x256xf32> to vector<8x256xf32>
    %59 = vector.shape_cast %55 : vector<8x256xf32> to vector<1x8x256xf32>
    tpu.vector_store %arg12[%56, %c0_33, %c0_34], %59 {strides = array<i32>} : memref<1x8x256xf32, #tpu.memory_space<vmem>>, vector<1x8x256xf32>,
    %c1_i32 = arith.constant 1 : i32
    return
  }
  func.func @transform_0(%arg0: i32) -> (i32, i32, i32) {
    %c0_i32 = arith.constant 0 : i32
    %c0_i32_0 = arith.constant 0 : i32
    %c0_i32_1 = arith.constant 0 : i32
    return %arg0, %c0_i32, %c0_i32_0 : i32, i32, i32
  }
  func.func @transform_1(%arg0: i32) -> (i32, i32, i32) {
    %c0_i32 = arith.constant 0 : i32
    %c0_i32_0 = arith.constant 0 : i32
    %c0_i32_1 = arith.constant 0 : i32
    return %arg0, %c0_i32, %c0_i32_0 : i32, i32, i32
  }
  func.func @transform_2(%arg0: i32) -> (i32, i32) {
    %c0_i32 = arith.constant 0 : i32
    %c0_i32_0 = arith.constant 0 : i32
    %c0_i32_1 = arith.constant 0 : i32
    return %c0_i32, %c0_i32_0 : i32, i32
  }
  func.func @transform_3(%arg0: i32) -> (i32, i32) {
    %c0_i32 = arith.constant 0 : i32
    %c0_i32_0 = arith.constant 0 : i32
    %c0_i32_1 = arith.constant 0 : i32
    return %c0_i32, %c0_i32_0 : i32, i32
  }
  func.func @transform_4(%arg0: i32) -> (i32, i32) {
    %c0_i32 = arith.constant 0 : i32
    %c0_i32_0 = arith.constant 0 : i32
    %c0_i32_1 = arith.constant 0 : i32
    return %c0_i32, %c0_i32_0 : i32, i32
  }
  func.func @transform_5(%arg0: i32) -> (i32, i32) {
    %c0_i32 = arith.constant 0 : i32
    %c0_i32_0 = arith.constant 0 : i32
    %c0_i32_1 = arith.constant 0 : i32
    return %c0_i32, %c0_i32_0 : i32, i32
  }
  func.func @transform_6(%arg0: i32) -> (i32, i32) {
    %c0_i32 = arith.constant 0 : i32
    %c0_i32_0 = arith.constant 0 : i32
    %c0_i32_1 = arith.constant 0 : i32
    return %c0_i32, %c0_i32_0 : i32, i32
  }
  func.func @transform_7(%arg0: i32) -> (i32, i32) {
    %c0_i32 = arith.constant 0 : i32
    %c0_i32_0 = arith.constant 0 : i32
    %c0_i32_1 = arith.constant 0 : i32
    return %c0_i32, %c0_i32_0 : i32, i32
  }
  func.func @transform_8(%arg0: i32) -> (i32, i32) {
    %c0_i32 = arith.constant 0 : i32
    %c0_i32_0 = arith.constant 0 : i32
    %c0_i32_1 = arith.constant 0 : i32
    return %c0_i32, %c0_i32_0 : i32, i32
  }
  func.func @transform_9(%arg0: i32) -> (i32, i32) {
    %c0_i32 = arith.constant 0 : i32
    %c0_i32_0 = arith.constant 0 : i32
    %c0_i32_1 = arith.constant 0 : i32
    return %c0_i32, %c0_i32_0 : i32, i32
  }
  func.func @transform_10(%arg0: i32) -> (i32, i32) {
    %c0_i32 = arith.constant 0 : i32
    %c0_i32_0 = arith.constant 0 : i32
    %c0_i32_1 = arith.constant 0 : i32
    return %c0_i32, %c0_i32_0 : i32, i32
  }
  func.func @transform_11(%arg0: i32) -> (i32, i32, i32) {
    %c0_i32 = arith.constant 0 : i32
    %c0_i32_0 = arith.constant 0 : i32
    %c0_i32_1 = arith.constant 0 : i32
    return %arg0, %c0_i32, %c0_i32_0 : i32, i32, i32
  }
}

module attributes {stable_mosaic.version = 11 : i64} {
  func.func @_gau_kernel(%arg0: i32, %arg1: memref<1x4x64xbf16, #tpu.memory_space<vmem>>, %arg2: memref<1x4x256xbf16, #tpu.memory_space<vmem>>, %arg3: memref<4x4xbf16, #tpu.memory_space<vmem>>, %arg4: memref<4x1xf32, #tpu.memory_space<vmem>>, %arg5: memref<4x4xbf16, #tpu.memory_space<vmem>>, %arg6: memref<4x1xf32, #tpu.memory_space<vmem>>, %arg7: memref<4x4xbf16, #tpu.memory_space<vmem>>, %arg8: memref<4x1xf32, #tpu.memory_space<vmem>>, %arg9: memref<8x4xbf16, #tpu.memory_space<vmem>>, %arg10: memref<8x4xbf16, #tpu.memory_space<vmem>>, %arg11: memref<8x1xf32, #tpu.memory_space<vmem>>, %arg12: memref<1x8x256xf32, #tpu.memory_space<vmem>>) attributes {dimension_semantics = [#tpu.dimension_semantics<parallel>], iteration_bounds = array<i64: 4>, scalar_prefetch = 0 : i64, scratch_operands = 0 : i64, tpu.core_type = #tpu.core_type<tc>, window_params = [{transform_indices = @transform_0, window_bounds = array<i64: 1, 4, 64>}, {transform_indices = @transform_1, window_bounds = array<i64: 1, 4, 256>}, {pipeline_mode = #tpu.pipeline_mode<synchronous>, transform_indices = @transform_2, window_bounds = array<i64: 4, 4>}, {pipeline_mode = #tpu.pipeline_mode<synchronous>, transform_indices = @transform_3, window_bounds = array<i64: 4, 1>}, {pipeline_mode = #tpu.pipeline_mode<synchronous>, transform_indices = @transform_4, window_bounds = array<i64: 4, 4>}, {pipeline_mode = #tpu.pipeline_mode<synchronous>, transform_indices = @transform_5, window_bounds = array<i64: 4, 1>}, {pipeline_mode = #tpu.pipeline_mode<synchronous>, transform_indices = @transform_6, window_bounds = array<i64: 4, 4>}, {pipeline_mode = #tpu.pipeline_mode<synchronous>, transform_indices = @transform_7, window_bounds = array<i64: 4, 1>}, {pipeline_mode = #tpu.pipeline_mode<synchronous>, transform_indices = @transform_8, window_bounds = array<i64: 8, 4>}, {pipeline_mode = #tpu.pipeline_mode<synchronous>, transform_indices = @transform_9, window_bounds = array<i64: 8, 4>}, {pipeline_mode = #tpu.pipeline_mode<synchronous>, transform_indices = @transform_10, window_bounds = array<i64: 8, 1>}, {transform_indices = @transform_11, window_bounds = array<i64: 1, 8, 256>}]} {
    %c0 = arith.constant 0 : index
    %c0_0 = arith.constant 0 : index
    %0 = vector.load %arg3[%c0, %c0_0] : memref<4x4xbf16, #tpu.memory_space<vmem>>, vector<4x4xbf16>
    %c0_1 = arith.constant 0 : index
    %c0_2 = arith.constant 0 : index
    %1 = vector.load %arg4[%c0_1, %c0_2] : memref<4x1xf32, #tpu.memory_space<vmem>>, vector<4x1xf32>
    %c0_3 = arith.constant 0 : index
    %c0_4 = arith.constant 0 : index
    %2 = vector.load %arg5[%c0_3, %c0_4] : memref<4x4xbf16, #tpu.memory_space<vmem>>, vector<4x4xbf16>
    %c0_5 = arith.constant 0 : index
    %c0_6 = arith.constant 0 : index
    %3 = vector.load %arg6[%c0_5, %c0_6] : memref<4x1xf32, #tpu.memory_space<vmem>>, vector<4x1xf32>
    %c0_7 = arith.constant 0 : index
    %c0_8 = arith.constant 0 : index
    %4 = vector.load %arg7[%c0_7, %c0_8] : memref<4x4xbf16, #tpu.memory_space<vmem>>, vector<4x4xbf16>
    %c0_9 = arith.constant 0 : index
    %c0_10 = arith.constant 0 : index
    %5 = vector.load %arg8[%c0_9, %c0_10] : memref<4x1xf32, #tpu.memory_space<vmem>>, vector<4x1xf32>
    %c0_11 = arith.constant 0 : index
    %c0_12 = arith.constant 0 : index
    %6 = vector.load %arg9[%c0_11, %c0_12] : memref<8x4xbf16, #tpu.memory_space<vmem>>, vector<8x4xbf16>
    %c0_13 = arith.constant 0 : index
    %c0_14 = arith.constant 0 : index
    %7 = vector.load %arg10[%c0_13, %c0_14] : memref<8x4xbf16, #tpu.memory_space<vmem>>, vector<8x4xbf16>
    %c0_15 = arith.constant 0 : index
    %c0_16 = arith.constant 0 : index
    %8 = vector.load %arg11[%c0_15, %c0_16] : memref<8x1xf32, #tpu.memory_space<vmem>>, vector<8x1xf32>
    %c0_i32 = arith.constant 0 : i32
    %9 = arith.index_cast %c0_i32 : i32 to index
    %c0_17 = arith.constant 0 : index
    %c0_18 = arith.constant 0 : index
    %10 = vector.load %arg1[%9, %c0_17, %c0_18] : memref<1x4x64xbf16, #tpu.memory_space<vmem>>, vector<1x4x64xbf16>
    %11 = vector.shape_cast %10 : vector<1x4x64xbf16> to vector<4x64xbf16>
    %12 = arith.index_cast %c0_i32 : i32 to index
    %c0_19 = arith.constant 0 : index
    %c0_20 = arith.constant 0 : index
    %13 = vector.load %arg2[%12, %c0_19, %c0_20] : memref<1x4x256xbf16, #tpu.memory_space<vmem>>, vector<1x4x256xbf16>
    %14 = vector.shape_cast %13 : vector<1x4x256xbf16> to vector<4x256xbf16>
    %cst = arith.constant dense<0.000000e+00> : vector<4x256xf32>
    %15 = tpu.matmul %0, %14, %cst {dimension_numbers = #tpu.dot_dimension_numbers<[1], [0], [0], [1], [0, 0, 1, 1], [], []>} : vector<4x4xbf16>, vector<4x256xbf16>, vector<4x256xf32> -> vector<4x256xf32>
    %16 = vector.broadcast %1 : vector<4x1xf32> to vector<4x256xf32>
    %17 = arith.addf %15, %16 : vector<4x256xf32>
    %cst_21 = arith.constant dense<0.000000e+00> : vector<4x64xf32>
    %18 = tpu.matmul %2, %11, %cst_21 {dimension_numbers = #tpu.dot_dimension_numbers<[1], [0], [0], [1], [0, 0, 1, 1], [], []>} : vector<4x4xbf16>, vector<4x64xbf16>, vector<4x64xf32> -> vector<4x64xf32>
    %19 = vector.broadcast %3 : vector<4x1xf32> to vector<4x64xf32>
    %20 = arith.addf %18, %19 : vector<4x64xf32>
    %cst_22 = arith.constant dense<0.000000e+00> : vector<4x256xf32>
    %21 = tpu.matmul %4, %14, %cst_22 {dimension_numbers = #tpu.dot_dimension_numbers<[1], [0], [0], [1], [0, 0, 1, 1], [], []>} : vector<4x4xbf16>, vector<4x256xbf16>, vector<4x256xf32> -> vector<4x256xf32>
    %22 = vector.broadcast %5 : vector<4x1xf32> to vector<4x256xf32>
    %23 = arith.addf %21, %22 : vector<4x256xf32>
    %cst_23 = arith.constant 0.000000e+00 : f32
    %24 = vector.broadcast %cst_23 : f32 to vector<4x256xf32>
    %25 = arith.maximumf %23, %24 : vector<4x256xf32>
    %cst_24 = arith.constant dense<0.000000e+00> : vector<4x64xf32>
    %26 = tpu.matmul %4, %11, %cst_24 {dimension_numbers = #tpu.dot_dimension_numbers<[1], [0], [0], [1], [0, 0, 1, 1], [], []>} : vector<4x4xbf16>, vector<4x64xbf16>, vector<4x64xf32> -> vector<4x64xf32>
    %27 = vector.broadcast %5 : vector<4x1xf32> to vector<4x64xf32>
    %28 = arith.addf %26, %27 : vector<4x64xf32>
    %cst_25 = arith.constant 0.000000e+00 : f32
    %29 = vector.broadcast %cst_25 : f32 to vector<4x64xf32>
    %30 = arith.maximumf %28, %29 : vector<4x64xf32>
    %31 = arith.truncf %20 : vector<4x64xf32> to vector<4x64xbf16>
    %32 = arith.truncf %17 : vector<4x256xf32> to vector<4x256xbf16>
    %cst_26 = arith.constant dense<0.000000e+00> : vector<64x256xf32>
    %33 = tpu.matmul %31, %32, %cst_26 {dimension_numbers = #tpu.dot_dimension_numbers<[0], [0], [1], [1], [0, 1, 1, 1], [], []>} : vector<4x64xbf16>, vector<4x256xbf16>, vector<64x256xf32> -> vector<64x256xf32>
    %cst_27 = arith.constant dense<0xFF800000> : vector<256xf32>
    %34 = vector.multi_reduction <maximumf>, %33, %cst_27 [0] : vector<64x256xf32> to vector<256xf32>
    %35 = vector.shape_cast %34 : vector<256xf32> to vector<1x256xf32>
    %36 = vector.broadcast %35 : vector<1x256xf32> to vector<64x256xf32>
    %37 = arith.subf %33, %36 : vector<64x256xf32>
    %38 = math.exp %37 : vector<64x256xf32>
    %cst_28 = arith.constant dense<0.000000e+00> : vector<256xf32>
    %39 = vector.multi_reduction <add>, %38, %cst_28 [0] : vector<64x256xf32> to vector<256xf32>
    %40 = vector.shape_cast %39 : vector<256xf32> to vector<1x256xf32>
    %41 = tpu.reciprocal %40 {approx = true} : vector<1x256xf32> -> vector<1x256xf32>
    %42 = arith.truncf %30 : vector<4x64xf32> to vector<4x64xbf16>
    %43 = arith.truncf %38 : vector<64x256xf32> to vector<64x256xbf16>
    %cst_29 = arith.constant dense<0.000000e+00> : vector<4x256xf32>
    %44 = tpu.matmul %42, %43, %cst_29 {dimension_numbers = #tpu.dot_dimension_numbers<[1], [0], [0], [1], [0, 0, 1, 1], [], []>} : vector<4x64xbf16>, vector<64x256xbf16>, vector<4x256xf32> -> vector<4x256xf32>
    %45 = arith.truncf %44 : vector<4x256xf32> to vector<4x256xbf16>
    %cst_30 = arith.constant dense<0.000000e+00> : vector<8x256xf32>
    %46 = tpu.matmul %6, %45, %cst_30 {dimension_numbers = #tpu.dot_dimension_numbers<[1], [0], [0], [1], [0, 0, 1, 1], [], []>} : vector<8x4xbf16>, vector<4x256xbf16>, vector<8x256xf32> -> vector<8x256xf32>
    %47 = vector.broadcast %41 : vector<1x256xf32> to vector<8x256xf32>
    %48 = arith.mulf %46, %47 : vector<8x256xf32>
    %49 = arith.truncf %25 : vector<4x256xf32> to vector<4x256xbf16>
    %cst_31 = arith.constant dense<0.000000e+00> : vector<8x256xf32>
    %50 = tpu.matmul %7, %49, %cst_31 {dimension_numbers = #tpu.dot_dimension_numbers<[1], [0], [0], [1], [0, 0, 1, 1], [], []>} : vector<8x4xbf16>, vector<4x256xbf16>, vector<8x256xf32> -> vector<8x256xf32>
    %51 = arith.addf %48, %50 : vector<8x256xf32>
    %52 = vector.broadcast %8 : vector<8x1xf32> to vector<8x256xf32>
    %53 = arith.addf %51, %52 : vector<8x256xf32>
    %cst_32 = arith.constant 0.000000e+00 : f32
    %54 = vector.broadcast %cst_32 : f32 to vector<8x256xf32>
    %55 = arith.maximumf %53, %54 : vector<8x256xf32>
    %56 = arith.index_cast %c0_i32 : i32 to index
    %c0_33 = arith.constant 0 : index
    %c0_34 = arith.constant 0 : index
    %57 = vector.load %arg12[%56, %c0_33, %c0_34] : memref<1x8x256xf32, #tpu.memory_space<vmem>>, vector<1x8x256xf32>
    %58 = vector.shape_cast %57 : vector<1x8x256xf32> to vector<8x256xf32>
    %59 = vector.shape_cast %55 : vector<8x256xf32> to vector<1x8x256xf32>
    tpu.vector_store %arg12[%56, %c0_33, %c0_34], %59 {strides = array<i32>} : memref<1x8x256xf32, #tpu.memory_space<vmem>>, vector<1x8x256xf32>,
    %c1_i32 = arith.constant 1 : i32
    return
  }
  func.func @transform_0(%arg0: i32) -> (i32, i32, i32) {
    %c0_i32 = arith.constant 0 : i32
    %c0_i32_0 = arith.constant 0 : i32
    %c0_i32_1 = arith.constant 0 : i32
    return %arg0, %c0_i32, %c0_i32_0 : i32, i32, i32
  }
  func.func @transform_1(%arg0: i32) -> (i32, i32, i32) {
    %c0_i32 = arith.constant 0 : i32
    %c0_i32_0 = arith.constant 0 : i32
    %c0_i32_1 = arith.constant 0 : i32
    return %arg0, %c0_i32, %c0_i32_0 : i32, i32, i32
  }
  func.func @transform_2(%arg0: i32) -> (i32, i32) {
    %c0_i32 = arith.constant 0 : i32
    %c0_i32_0 = arith.constant 0 : i32
    %c0_i32_1 = arith.constant 0 : i32
    return %c0_i32, %c0_i32_0 : i32, i32
  }
  func.func @transform_3(%arg0: i32) -> (i32, i32) {
    %c0_i32 = arith.constant 0 : i32
    %c0_i32_0 = arith.constant 0 : i32
    %c0_i32_1 = arith.constant 0 : i32
    return %c0_i32, %c0_i32_0 : i32, i32
  }
  func.func @transform_4(%arg0: i32) -> (i32, i32) {
    %c0_i32 = arith.constant 0 : i32
    %c0_i32_0 = arith.constant 0 : i32
    %c0_i32_1 = arith.constant 0 : i32
    return %c0_i32, %c0_i32_0 : i32, i32
  }
  func.func @transform_5(%arg0: i32) -> (i32, i32) {
    %c0_i32 = arith.constant 0 : i32
    %c0_i32_0 = arith.constant 0 : i32
    %c0_i32_1 = arith.constant 0 : i32
    return %c0_i32, %c0_i32_0 : i32, i32
  }
  func.func @transform_6(%arg0: i32) -> (i32, i32) {
    %c0_i32 = arith.constant 0 : i32
    %c0_i32_0 = arith.constant 0 : i32
    %c0_i32_1 = arith.constant 0 : i32
    return %c0_i32, %c0_i32_0 : i32, i32
  }
  func.func @transform_7(%arg0: i32) -> (i32, i32) {
    %c0_i32 = arith.constant 0 : i32
    %c0_i32_0 = arith.constant 0 : i32
    %c0_i32_1 = arith.constant 0 : i32
    return %c0_i32, %c0_i32_0 : i32, i32
  }
  func.func @transform_8(%arg0: i32) -> (i32, i32) {
    %c0_i32 = arith.constant 0 : i32
    %c0_i32_0 = arith.constant 0 : i32
    %c0_i32_1 = arith.constant 0 : i32
    return %c0_i32, %c0_i32_0 : i32, i32
  }
  func.func @transform_9(%arg0: i32) -> (i32, i32) {
    %c0_i32 = arith.constant 0 : i32
    %c0_i32_0 = arith.constant 0 : i32
    %c0_i32_1 = arith.constant 0 : i32
    return %c0_i32, %c0_i32_0 : i32, i32
  }
  func.func @transform_10(%arg0: i32) -> (i32, i32) {
    %c0_i32 = arith.constant 0 : i32
    %c0_i32_0 = arith.constant 0 : i32
    %c0_i32_1 = arith.constant 0 : i32
    return %c0_i32, %c0_i32_0 : i32, i32
  }
  func.func @transform_11(%arg0: i32) -> (i32, i32, i32) {
    %c0_i32 = arith.constant 0 : i32
    %c0_i32_0 = arith.constant 0 : i32
    %c0_i32_1 = arith.constant 0 : i32
    return %arg0, %c0_i32, %c0_i32_0 : i32, i32, i32
  }
}

</mosaic_0001>

<llo_original>
// kernel: tpu_custom_call.1
$region0: #{tpu_custom_call.1}
  #allocation0 [shape = 'u32[]', space=smem, size = 0x4, offset = 0x4, fixed_abs, tag = 'smem constant byte address 0x4 - core index']
  #allocation1 [shape = 'u32[144,128]{1,0:T(1,128)}', space=vmem, size = 0x12000, scoped, tag = 'internal scratch']
  %s0 = inlined_call_operand.vmem [shape: bf16[4,4,64], index: 0, kind: input, shape index: {}]
  %s1 = inlined_call_operand.hbm [shape: bf16[4,4,256], index: 1, kind: input, shape index: {}]
  %s2 = inlined_call_operand.vmem [shape: bf16[4,4], index: 2, kind: input, shape index: {}]
  %s3 = inlined_call_operand.vmem [shape: f32[4,1], index: 3, kind: input, shape index: {}]
  %s4 = inlined_call_operand.vmem [shape: bf16[4,4], index: 4, kind: input, shape index: {}]
  %s5 = inlined_call_operand.vmem [shape: f32[4,1], index: 5, kind: input, shape index: {}]
  %s6 = inlined_call_operand.vmem [shape: bf16[4,4], index: 6, kind: input, shape index: {}]
  %s7 = inlined_call_operand.vmem [shape: f32[4,1], index: 7, kind: input, shape index: {}]
  %s8 = inlined_call_operand.vmem [shape: bf16[8,4], index: 8, kind: input, shape index: {}]
  %s9 = inlined_call_operand.vmem [shape: bf16[8,4], index: 9, kind: input, shape index: {}]
  %s10 = inlined_call_operand.vmem [shape: f32[8,1], index: 10, kind: input, shape index: {}]
  %s11 = inlined_call_operand.hbm [shape: f32[4,8,256], index: 11, kind: output, shape index: {}]
  %s12 = sld [smem:[#allocation0]]
  $region81: #{tpu_custom_call.1} parent=0
    _
  %s14 = ssub.s32 1, %s12
  %s15 = scalar_select 0, %s14, %s12
  $region1: #{tpu_custom_call.1} parent=0
    #allocation2 [shape = 'u8[4096]{0}', space=vmem, size = 0x1000, scoped, tag = 'input window, operand 1']
    #allocation3 [shape = 's32[2]{0}', space=sflag, size = 0x8, scoped, tag = 'scoped memory for tpu_custom_call.1']
    #allocation4 [shape = 's32[2]{0}', space=sflag, size = 0x8, scoped, tag = 'scoped memory for tpu_custom_call.1']
    #allocation5 [shape = 'u8[16384]{0}', space=vmem, size = 0x4000, scoped, tag = 'output window, operand 0']
    %16 = vsyncpa [#allocation3], 0
    %s17 = scalar_lea.sflag [#allocation3], 1
    %18 = vsyncpa %s17, 0
    %19 = vsyncpa [#allocation4], 0
    %s20 = scalar_lea.sflag [#allocation4], 1
    %21 = vsyncpa %s20, 0
    loop: start=0, step=1, limit=6
    $region2: #{tpu_custom_call.1} parent=1 // loop_pre_header
      _
    $region3: #{tpu_custom_call.1} parent=1 // loop_header
      %s23 = sphi 0, %s27
      %p24 = scmp.ge.s32.totalorder %s23, 6
      %s33 = sphi 0, %s35
      %s36 = sphi 0, %s33
      %s37 = sphi 0, %s36
      %s53 = sphi 0, %s37
      %s59 = sphi 0, %s61
      %s62 = sphi 0, %s59
      %s63 = sphi 0, %s62
      %s79 = sphi 0, %s63
      %s83 = sphi 0, %s83
      %s85 = sphi 0, %s83
      %s86 = sphi 0, %s85
      %s100 = sphi 0, %s86
      %s104 = sphi 0, %s104
      %s106 = sphi 0, %s104
      %s107 = sphi 0, %s106
      %s121 = sphi 0, %s107
      %s125 = sphi 0, %s125
      %s127 = sphi 0, %s125
      %s128 = sphi 0, %s127
      %s142 = sphi 0, %s128
      %s146 = sphi 0, %s146
      %s148 = sphi 0, %s146
      %s149 = sphi 0, %s148
      %s163 = sphi 0, %s149
      %s167 = sphi 0, %s167
      %s169 = sphi 0, %s167
      %s170 = sphi 0, %s169
      %s184 = sphi 0, %s170
      %s188 = sphi 0, %s188
      %s190 = sphi 0, %s188
      %s191 = sphi 0, %s190
      %s205 = sphi 0, %s191
      %s209 = sphi 0, %s209
      %s211 = sphi 0, %s209
      %s212 = sphi 0, %s211
      %s226 = sphi 0, %s212
      %s230 = sphi 0, %s230
      %s232 = sphi 0, %s230
      %s233 = sphi 0, %s232
      %s247 = sphi 0, %s233
      %s251 = sphi 0, %s251
      %s253 = sphi 0, %s251
      %s254 = sphi 0, %s253
      %s268 = sphi 0, %s254
      %s274 = sphi 0, %s276
      %s277 = sphi 0, %s274
      %s278 = sphi 0, %s277
      %s294 = sphi 0, %s278
    $region4: #{tpu_custom_call.1} parent=1 // loop_header_branch
      %26 = sbr.rel (%p24) target = $region8
    $region5: #{tpu_custom_call.1} parent=1 // loop_body
      %s28 = ssub.s32 %s23, 1
      %s29 = ssub.s32 %s23, 2
      %s30 = sadd.s32 %s23, 1
      %s31 = ssub.s32 %s23, %s30
      %p32 = scmp.eq.s32.totalorder %s31, 0
      %s34 = sadd.s32 %s33, 1
      %s35 = scalar_select %p32, %s33, %s34
      %p38 = pneg %p32
      %p39 = scmp.eq.s32.totalorder %s23, 3
      %p40 = por %p38, %p39
      %p41 = scmp.ne.s32.totalorder %s33, %s36
      %p42 = scmp.eq.s32.totalorder %s23, 0
      %p43 = por %p41, %p42
      %p44 = scmp.ne.s32.totalorder %s33, %s36
      %p45 = scmp.eq.s32.totalorder %s28, 3
      %p46 = por %p44, %p45
      %p47 = scmp.ne.s32.totalorder %s36, %s37
      %p48 = scmp.eq.s32.totalorder %s28, 0
      %p49 = por %p47, %p48
      %p50 = scmp.ne.s32.totalorder %s36, %s37
      %p51 = scmp.eq.s32.totalorder %s29, 3
      %p52 = por %p50, %p51
      %p54 = scmp.ne.s32.totalorder %s37, %s53
      %p55 = scmp.eq.s32.totalorder %s29, 0
      %p56 = por %p54, %p55
      %s57 = ssub.s32 %s23, %s30
      %p58 = scmp.eq.s32.totalorder %s57, 0
      %s60 = sadd.s32 %s59, 1
      %s61 = scalar_select %p58, %s59, %s60
      %p64 = pneg %p58
      %p65 = scmp.eq.s32.totalorder %s23, 3
      %p66 = por %p64, %p65
      %p67 = scmp.ne.s32.totalorder %s59, %s62
      %p68 = scmp.eq.s32.totalorder %s23, 0
      %p69 = por %p67, %p68
      %p70 = scmp.ne.s32.totalorder %s59, %s62
      %p71 = scmp.eq.s32.totalorder %s28, 3
      %p72 = por %p70, %p71
      %p73 = scmp.ne.s32.totalorder %s62, %s63
      %p74 = scmp.eq.s32.totalorder %s28, 0
      %p75 = por %p73, %p74
      %p76 = scmp.ne.s32.totalorder %s62, %s63
      %p77 = scmp.eq.s32.totalorder %s29, 3
      %p78 = por %p76, %p77
      %p80 = scmp.ne.s32.totalorder %s63, %s79
      %p81 = scmp.eq.s32.totalorder %s29, 0
      %p82 = por %p80, %p81
      %s84 = sadd.s32 %s83, 1
      %p87 = scmp.eq.s32.totalorder %s23, 3
      %p88 = scmp.ne.s32.totalorder %s83, %s85
      %p89 = scmp.eq.s32.totalorder %s23, 0
      %p90 = por %p88, %p89
      %p91 = scmp.ne.s32.totalorder %s83, %s85
      %p92 = scmp.eq.s32.totalorder %s28, 3
      %p93 = por %p91, %p92
      %p94 = scmp.ne.s32.totalorder %s85, %s86
      %p95 = scmp.eq.s32.totalorder %s28, 0
      %p96 = por %p94, %p95
      %p97 = scmp.ne.s32.totalorder %s85, %s86
      %p98 = scmp.eq.s32.totalorder %s29, 3
      %p99 = por %p97, %p98
      %p101 = scmp.ne.s32.totalorder %s86, %s100
      %p102 = scmp.eq.s32.totalorder %s29, 0
      %p103 = por %p101, %p102
      %s105 = sadd.s32 %s104, 1
      %p108 = scmp.eq.s32.totalorder %s23, 3
      %p109 = scmp.ne.s32.totalorder %s104, %s106
      %p110 = scmp.eq.s32.totalorder %s23, 0
      %p111 = por %p109, %p110
      %p112 = scmp.ne.s32.totalorder %s104, %s106
      %p113 = scmp.eq.s32.totalorder %s28, 3
      %p114 = por %p112, %p113
      %p115 = scmp.ne.s32.totalorder %s106, %s107
      %p116 = scmp.eq.s32.totalorder %s28, 0
      %p117 = por %p115, %p116
      %p118 = scmp.ne.s32.totalorder %s106, %s107
      %p119 = scmp.eq.s32.totalorder %s29, 3
      %p120 = por %p118, %p119
      %p122 = scmp.ne.s32.totalorder %s107, %s121
      %p123 = scmp.eq.s32.totalorder %s29, 0
      %p124 = por %p122, %p123
      %s126 = sadd.s32 %s125, 1
      %p129 = scmp.eq.s32.totalorder %s23, 3
      %p130 = scmp.ne.s32.totalorder %s125, %s127
      %p131 = scmp.eq.s32.totalorder %s23, 0
      %p132 = por %p130, %p131
      %p133 = scmp.ne.s32.totalorder %s125, %s127
      %p134 = scmp.eq.s32.totalorder %s28, 3
      %p135 = por %p133, %p134
      %p136 = scmp.ne.s32.totalorder %s127, %s128
      %p137 = scmp.eq.s32.totalorder %s28, 0
      %p138 = por %p136, %p137
      %p139 = scmp.ne.s32.totalorder %s127, %s128
      %p140 = scmp.eq.s32.totalorder %s29, 3
      %p141 = por %p139, %p140
      %p143 = scmp.ne.s32.totalorder %s128, %s142
      %p144 = scmp.eq.s32.totalorder %s29, 0
      %p145 = por %p143, %p144
      %s147 = sadd.s32 %s146, 1
      %p150 = scmp.eq.s32.totalorder %s23, 3
      %p151 = scmp.ne.s32.totalorder %s146, %s148
      %p152 = scmp.eq.s32.totalorder %s23, 0
      %p153 = por %p151, %p152
      %p154 = scmp.ne.s32.totalorder %s146, %s148
      %p155 = scmp.eq.s32.totalorder %s28, 3
      %p156 = por %p154, %p155
      %p157 = scmp.ne.s32.totalorder %s148, %s149
      %p158 = scmp.eq.s32.totalorder %s28, 0
      %p159 = por %p157, %p158
      %p160 = scmp.ne.s32.totalorder %s148, %s149
      %p161 = scmp.eq.s32.totalorder %s29, 3
      %p162 = por %p160, %p161
      %p164 = scmp.ne.s32.totalorder %s149, %s163
      %p165 = scmp.eq.s32.totalorder %s29, 0
      %p166 = por %p164, %p165
      %s168 = sadd.s32 %s167, 1
      %p171 = scmp.eq.s32.totalorder %s23, 3
      %p172 = scmp.ne.s32.totalorder %s167, %s169
      %p173 = scmp.eq.s32.totalorder %s23, 0
      %p174 = por %p172, %p173
      %p175 = scmp.ne.s32.totalorder %s167, %s169
      %p176 = scmp.eq.s32.totalorder %s28, 3
      %p177 = por %p175, %p176
      %p178 = scmp.ne.s32.totalorder %s169, %s170
      %p179 = scmp.eq.s32.totalorder %s28, 0
      %p180 = por %p178, %p179
      %p181 = scmp.ne.s32.totalorder %s169, %s170
      %p182 = scmp.eq.s32.totalorder %s29, 3
      %p183 = por %p181, %p182
      %p185 = scmp.ne.s32.totalorder %s170, %s184
      %p186 = scmp.eq.s32.totalorder %s29, 0
      %p187 = por %p185, %p186
      %s189 = sadd.s32 %s188, 1
      %p192 = scmp.eq.s32.totalorder %s23, 3
      %p193 = scmp.ne.s32.totalorder %s188, %s190
      %p194 = scmp.eq.s32.totalorder %s23, 0
      %p195 = por %p193, %p194
      %p196 = scmp.ne.s32.totalorder %s188, %s190
      %p197 = scmp.eq.s32.totalorder %s28, 3
      %p198 = por %p196, %p197
      %p199 = scmp.ne.s32.totalorder %s190, %s191
      %p200 = scmp.eq.s32.totalorder %s28, 0
      %p201 = por %p199, %p200
      %p202 = scmp.ne.s32.totalorder %s190, %s191
      %p203 = scmp.eq.s32.totalorder %s29, 3
      %p204 = por %p202, %p203
      %p206 = scmp.ne.s32.totalorder %s191, %s205
      %p207 = scmp.eq.s32.totalorder %s29, 0
      %p208 = por %p206, %p207
      %s210 = sadd.s32 %s209, 1
      %p213 = scmp.eq.s32.totalorder %s23, 3
      %p214 = scmp.ne.s32.totalorder %s209, %s211
      %p215 = scmp.eq.s32.totalorder %s23, 0
      %p216 = por %p214, %p215
      %p217 = scmp.ne.s32.totalorder %s209, %s211
      %p218 = scmp.eq.s32.totalorder %s28, 3
      %p219 = por %p217, %p218
      %p220 = scmp.ne.s32.totalorder %s211, %s212
      %p221 = scmp.eq.s32.totalorder %s28, 0
      %p222 = por %p220, %p221
      %p223 = scmp.ne.s32.totalorder %s211, %s212
      %p224 = scmp.eq.s32.totalorder %s29, 3
      %p225 = por %p223, %p224
      %p227 = scmp.ne.s32.totalorder %s212, %s226
      %p228 = scmp.eq.s32.totalorder %s29, 0
      %p229 = por %p227, %p228
      %s231 = sadd.s32 %s230, 1
      %p234 = scmp.eq.s32.totalorder %s23, 3
      %p235 = scmp.ne.s32.totalorder %s230, %s232
      %p236 = scmp.eq.s32.totalorder %s23, 0
      %p237 = por %p235, %p236
      %p238 = scmp.ne.s32.totalorder %s230, %s232
      %p239 = scmp.eq.s32.totalorder %s28, 3
      %p240 = por %p238, %p239
      %p241 = scmp.ne.s32.totalorder %s232, %s233
      %p242 = scmp.eq.s32.totalorder %s28, 0
      %p243 = por %p241, %p242
      %p244 = scmp.ne.s32.totalorder %s232, %s233
      %p245 = scmp.eq.s32.totalorder %s29, 3
      %p246 = por %p244, %p245
      %p248 = scmp.ne.s32.totalorder %s233, %s247
      %p249 = scmp.eq.s32.totalorder %s29, 0
      %p250 = por %p248, %p249
      %s252 = sadd.s32 %s251, 1
      %p255 = scmp.eq.s32.totalorder %s23, 3
      %p256 = scmp.ne.s32.totalorder %s251, %s253
      %p257 = scmp.eq.s32.totalorder %s23, 0
      %p258 = por %p256, %p257
      %p259 = scmp.ne.s32.totalorder %s251, %s253
      %p260 = scmp.eq.s32.totalorder %s28, 3
      %p261 = por %p259, %p260
      %p262 = scmp.ne.s32.totalorder %s253, %s254
      %p263 = scmp.eq.s32.totalorder %s28, 0
      %p264 = por %p262, %p263
      %p265 = scmp.ne.s32.totalorder %s253, %s254
      %p266 = scmp.eq.s32.totalorder %s29, 3
      %p267 = por %p265, %p266
      %p269 = scmp.ne.s32.totalorder %s254, %s268
      %p270 = scmp.eq.s32.totalorder %s29, 0
      %p271 = por %p269, %p270
      %s272 = ssub.s32 %s23, %s30
      %p273 = scmp.eq.s32.totalorder %s272, 0
      %s275 = sadd.s32 %s274, 1
      %s276 = scalar_select %p273, %s274, %s275
      %p279 = pneg %p273
      %p280 = scmp.eq.s32.totalorder %s23, 3
      %p281 = por %p279, %p280
      %p282 = scmp.ne.s32.totalorder %s274, %s277
      %p283 = scmp.eq.s32.totalorder %s23, 0
      %p284 = por %p282, %p283
      %p285 = scmp.ne.s32.totalorder %s274, %s277
      %p286 = scmp.eq.s32.totalorder %s28, 3
      %p287 = por %p285, %p286
      %p288 = scmp.ne.s32.totalorder %s277, %s278
      %p289 = scmp.eq.s32.totalorder %s28, 0
      %p290 = por %p288, %p289
      %p291 = scmp.ne.s32.totalorder %s277, %s278
      %p292 = scmp.eq.s32.totalorder %s29, 3
      %p293 = por %p291, %p292
      %p295 = scmp.ne.s32.totalorder %s278, %s294
      %p296 = scmp.eq.s32.totalorder %s29, 0
      %p297 = por %p295, %p296
      %p298 = scmp.le.s32.totalorder 1, %s23
      %p299 = scmp.lt.s32.totalorder %s23, 5
      %p300 = pnand %p298, %p299
      %p301 = pneg %p300
      // Predicated region
      $region9: #{tpu_custom_call.1} parent=5 // pred_check
        _
      $region10: #{tpu_custom_call.1} parent=5 // pred_check_branch
        %303 = sbr.rel (%p300) target = $region12
      $region11: #{tpu_custom_call.1} parent=5 // pred_region
        %s304 = ssub.s32 %s23, 1
        // Predicated region
        $region13: #{tpu_custom_call.1} parent=11 // pred_check
          %p305 = pneg %p96
        $region14: #{tpu_custom_call.1} parent=11 // pred_check_branch
          %307 = sbr.rel (%p305) target = $region16
        $region15: #{tpu_custom_call.1} parent=11 // pred_region
          _
        $region16: #{tpu_custom_call.1} parent=11 // pred_fallthru
          _
        // Predicated region
        $region17: #{tpu_custom_call.1} parent=11 // pred_check
          %p308 = pneg %p117
        $region18: #{tpu_custom_call.1} parent=11 // pred_check_branch
          %310 = sbr.rel (%p308) target = $region20
        $region19: #{tpu_custom_call.1} parent=11 // pred_region
          _
        $region20: #{tpu_custom_call.1} parent=11 // pred_fallthru
          _
        // Predicated region
        $region21: #{tpu_custom_call.1} parent=11 // pred_check
          %p311 = pneg %p138
        $region22: #{tpu_custom_call.1} parent=11 // pred_check_branch
          %313 = sbr.rel (%p311) target = $region24
        $region23: #{tpu_custom_call.1} parent=11 // pred_region
          _
        $region24: #{tpu_custom_call.1} parent=11 // pred_fallthru
          _
        // Predicated region
        $region25: #{tpu_custom_call.1} parent=11 // pred_check
          %p314 = pneg %p159
        $region26: #{tpu_custom_call.1} parent=11 // pred_check_branch
          %316 = sbr.rel (%p314) target = $region28
        $region27: #{tpu_custom_call.1} parent=11 // pred_region
          _
        $region28: #{tpu_custom_call.1} parent=11 // pred_fallthru
          _
        // Predicated region
        $region29: #{tpu_custom_call.1} parent=11 // pred_check
          %p317 = pneg %p180
        $region30: #{tpu_custom_call.1} parent=11 // pred_check_branch
          %319 = sbr.rel (%p317) target = $region32
        $region31: #{tpu_custom_call.1} parent=11 // pred_region
          _
        $region32: #{tpu_custom_call.1} parent=11 // pred_fallthru
          _
        // Predicated region
        $region33: #{tpu_custom_call.1} parent=11 // pred_check
          %p320 = pneg %p201
        $region34: #{tpu_custom_call.1} parent=11 // pred_check_branch
          %322 = sbr.rel (%p320) target = $region36
        $region35: #{tpu_custom_call.1} parent=11 // pred_region
          _
        $region36: #{tpu_custom_call.1} parent=11 // pred_fallthru
          _
        // Predicated region
        $region37: #{tpu_custom_call.1} parent=11 // pred_check
          %p323 = pneg %p222
        $region38: #{tpu_custom_call.1} parent=11 // pred_check_branch
          %325 = sbr.rel (%p323) target = $region40
        $region39: #{tpu_custom_call.1} parent=11 // pred_region
          _
        $region40: #{tpu_custom_call.1} parent=11 // pred_fallthru
          _
        // Predicated region
        $region41: #{tpu_custom_call.1} parent=11 // pred_check
          %p326 = pneg %p243
        $region42: #{tpu_custom_call.1} parent=11 // pred_check_branch
          %328 = sbr.rel (%p326) target = $region44
        $region43: #{tpu_custom_call.1} parent=11 // pred_region
          _
        $region44: #{tpu_custom_call.1} parent=11 // pred_fallthru
          _
        // Predicated region
        $region45: #{tpu_custom_call.1} parent=11 // pred_check
          %p329 = pneg %p264
        $region46: #{tpu_custom_call.1} parent=11 // pred_check_branch
          %331 = sbr.rel (%p329) target = $region48
        $region47: #{tpu_custom_call.1} parent=11 // pred_region
          _
        $region48: #{tpu_custom_call.1} parent=11 // pred_fallthru
          _
      $region12: #{tpu_custom_call.1} parent=5 // pred_fallthru
        _
      %p332 = scmp.lt.s32.totalorder %s23, 4
      // Predicated region
      $region49: #{tpu_custom_call.1} parent=5 // pred_check
        %p333 = pneg %p332
      $region50: #{tpu_custom_call.1} parent=5 // pred_check_branch
        %335 = sbr.rel (%p333) target = $region52
      $region51: #{tpu_custom_call.1} parent=5 // pred_region
        // Predicated region
        $region53: #{tpu_custom_call.1} parent=51 // pred_check
          %p336 = pneg %p43
        $region54: #{tpu_custom_call.1} parent=51 // pred_check_branch
          %338 = sbr.rel (%p336) target = $region56
        $region55: #{tpu_custom_call.1} parent=51 // pred_region
          %p339 = scmp.lt.s32.totalorder %s23, 3
          %s340 = scalar_select %p339, %s23, 3
          %s341 = smul.addr %s340, 2
          %s342 = scalar_lea.vmem %s0, %s341
        $region56: #{tpu_custom_call.1} parent=51 // pred_fallthru
          _
        // Predicated region
        $region57: #{tpu_custom_call.1} parent=51 // pred_check
          %p343 = pneg %p69
        $region58: #{tpu_custom_call.1} parent=51 // pred_check_branch
          %345 = sbr.rel (%p343) target = $region60
        $region59: #{tpu_custom_call.1} parent=51 // pred_region
          %s346 = sand.u32 %s59, 1
          %s347 = scalar_lea.sflag [#allocation3], %s346
          %s348 = sand.u32 %s59, 1
          %s349 = smul.addr %s348, 4
          %s350 = scalar_lea.vmem [#allocation2], %s349
          %s352 = ssub.s32 64, 64
          %353 = vsyncadd %s347, %s352
          %s354 = smul.addr %s23, 2
          %s355 = smul.addr %s354, 32
          %s356 = scalar_lea.hbm %s1, %s355
          %s358 = sshll.u32 %s350, 4
          %s359 = int_to_ptr.vmem [resolvable:$true] %s358
          %361 = dma.hbm_to_vmem [thread:$0]  %s356, 64, %s359, %s347
        $region60: #{tpu_custom_call.1} parent=51 // pred_fallthru
          _
      $region52: #{tpu_custom_call.1} parent=5 // pred_fallthru
        _
      %p362 = scmp.le.s32.totalorder 1, %s23
      %p363 = scmp.lt.s32.totalorder %s23, 5
      %p364 = pnand %p362, %p363
      %p365 = pneg %p364
      // Predicated region
      $region61: #{tpu_custom_call.1} parent=5 // pred_check
        _
      $region62: #{tpu_custom_call.1} parent=5 // pred_check_branch
        %367 = sbr.rel (%p364) target = $region64
      $region63: #{tpu_custom_call.1} parent=5 // pred_region
        %s368 = ssub.s32 %s23, 1
        %s369 = sand.u32 %s62, 1
        %s370 = scalar_lea.sflag [#allocation3], %s369
        %s371 = sand.u32 %s62, 1
        %s372 = smul.addr %s371, 4
        %s373 = scalar_lea.vmem [#allocation2], %s372
        // Predicated region
        $region65: #{tpu_custom_call.1} parent=63 // pred_check
          %p374 = pneg %p75
        $region66: #{tpu_custom_call.1} parent=63 // pred_check_branch
          %376 = sbr.rel (%p374) target = $region68
        $region67: #{tpu_custom_call.1} parent=63 // pred_region
          %377 = dma.done %s370, 64
        $region68: #{tpu_custom_call.1} parent=63 // pred_fallthru
          _
        %p378 = scmp.lt.s32.totalorder %s28, 3
        %s379 = scalar_select %p378, %s28, 3
        %s380 = smul.addr %s379, 2
        %s381 = scalar_lea.vmem %s0, %s380
        %p382 = pneg %p49
        %p383 = pneg %p46
        %s384 = sand.u32 %s62, 1
        %s385 = scalar_lea.sflag [#allocation3], %s384
        %s386 = sand.u32 %s62, 1
        %s387 = smul.addr %s386, 4
        %s388 = scalar_lea.vmem [#allocation2], %s387
        %p389 = pneg %p75
        %p390 = pneg %p72
        %p391 = pneg %p96
        %p392 = pneg %p93
        %p393 = pneg %p117
        %p394 = pneg %p114
        %p395 = pneg %p138
        %p396 = pneg %p135
        %p397 = pneg %p159
        %p398 = pneg %p156
        %p399 = pneg %p180
        %p400 = pneg %p177
        %p401 = pneg %p201
        %p402 = pneg %p198
        %p403 = pneg %p222
        %p404 = pneg %p219
        %p405 = pneg %p243
        %p406 = pneg %p240
        %p407 = pneg %p264
        %p408 = pneg %p261
        %p409 = pneg %p290
        %p410 = pneg %p287
        %s411 = sand.u32 %s277, 1
        %s412 = scalar_lea.sflag [#allocation4], %s411
        %s413 = sand.u32 %s277, 1
        %s414 = smul.addr %s413, 16
        %s415 = scalar_lea.vmem [#allocation5], %s414
        %p416 = scmp.lt.s32.totalorder %s28, 3
        %s417 = scalar_select %p416, %s28, 3
        %s418 = smul.addr %s417, 2
        %s419 = scalar_lea.vmem %s0, %s418
        %v421 = vld [vmem:[%s2] sm:$0x3]
        %v422 = vld [vmem:[%s3] sm:$0xf]
        %v423 = vld [vmem:[%s4] sm:$0x3]
        %v424 = vld [vmem:[%s5] sm:$0xf]
        %v425 = vld [vmem:[%s6] sm:$0x3]
        %v426 = vld [vmem:[%s7] sm:$0xf]
        %v427 = vld [vmem:[%s8] sm:$0xf]
        %v428 = vld [vmem:[%s9] sm:$0xf]
        %v429 = vld [vmem:[%s10] sm:$0xff]
        %v430 = vld [vmem:[%s419] sm:$0x3]
        %v431 = vld [vmem:[%s373] sm:$0xf]
        %433 = vset.pattern.permute.xlu0 0
        %434 = vperm.xlu0 %433, %v422
        %v435 = vpop.permute.xlu0 %434
        %v439 = vunpack.c.l.s4 1983009808
        %v440 = vunpack.c.0.s8 %v439
        %v441 = vlaneseq
        %v442 = vshrl.u32 %v441, 7
        %v443 = vsub.s32 %v440, %v442
        %v444 = vrot.slane %v431, %v443
        %v445 = vcombine.high %v444, %v444
        %vm446 = vcmask 31744
        %v448 = vsel %vm446, %v421, 0
        %vm450 = vcmask 1041408
        %v452 = vsel %vm450, %v444, 0
        %v455 = vsel %vm450, %v445, 0
        %457 = vmatprep.subr.bf16.mxu0 %v455
        %458 = vmatpush1.bf16.msra.mxu0 %v452
        %459 = vmatprep.subr.bf16.mxu0 0
        %460 = vmatpush1.bf16.msra.mxu0 0
        %461 = vmatprep.subr.bf16.mxu0 0
        %462 = vmatpush1.bf16.msra.mxu0 0
        %463 = vmatprep.subr.bf16.mxu0 0
        %464 = vmatpush1.bf16.msra.mxu0 0
        %465 = vmatprep.subr.bf16.mxu0 0
        %466 = vmatpush1.bf16.msra.mxu0 0
        %467 = vmatprep.subr.bf16.mxu0 0
        %468 = vmatpush1.bf16.msra.mxu0 0
        %469 = vmatprep.subr.bf16.mxu0 0
        %470 = vmatpush1.bf16.msra.mxu0 0
        %471 = vmatprep.subr.bf16.mxu0 0
        %472 = vmatpush1.bf16.msra.mxu0 0
        %473 = vmatprep.subr.bf16.mxu0 0
        %474 = vmatpush1.bf16.msra.mxu0 0
        %475 = vmatprep.subr.bf16.mxu0 0
        %476 = vmatpush1.bf16.msra.mxu0 0
        %477 = vmatprep.subr.bf16.mxu0 0
        %478 = vmatpush1.bf16.msra.mxu0 0
        %479 = vmatprep.subr.bf16.mxu0 0
        %480 = vmatpush1.bf16.msra.mxu0 0
        %481 = vmatprep.subr.bf16.mxu0 0
        %482 = vmatpush1.bf16.msra.mxu0 0
        %483 = vmatprep.subr.bf16.mxu0 0
        %484 = vmatpush1.bf16.msra.mxu0 0
        %485 = vmatprep.subr.bf16.mxu0 0
        %486 = vmatpush1.bf16.msra.mxu0 0
        %487 = vmatprep.subr.bf16.mxu0 0
        %488 = vmatpush1.bf16.msra.mxu0 0
        %489 = vmatprep.mubr.bf16.mxu0 0
        %490 = vmatmul.mubr.bf16.gmra.mrb[0].mxu0 %v448
        %v491 = vpop.f32.mrb[0].mxu0
        %v492 = vadd.f32 %v435, %v491
        %v493 = vpop.f32.mrb[0].mxu0
        %v494 = vadd.f32 %v435, %v493
        %v495 = vpop.f32.mrb[0].mxu0
        %v496 = vpop.f32.mrb[0].mxu0
        %497 = vdwg.mxu0
        %499 = vset.pattern.permute.xlu0 0
        %500 = vperm.xlu0 %499, %v424
        %v501 = vpop.permute.xlu0 %500
        %v504 = vsel %vm446, %v423, 0
        %v507 = vsel %vm450, %v430, 0
        %509 = vmatprep.subr.bf16.mxu0 0
        %510 = vmatpush1.bf16.msra.mxu0 %v507
        %511 = vmatprep.subr.bf16.mxu0 0
        %512 = vmatpush1.bf16.msra.mxu0 0
        %513 = vmatprep.subr.bf16.mxu0 0
        %514 = vmatpush1.bf16.msra.mxu0 0
        %515 = vmatprep.subr.bf16.mxu0 0
        %516 = vmatpush1.bf16.msra.mxu0 0
        %517 = vmatprep.subr.bf16.mxu0 0
        %518 = vmatpush1.bf16.msra.mxu0 0
        %519 = vmatprep.subr.bf16.mxu0 0
        %520 = vmatpush1.bf16.msra.mxu0 0
        %521 = vmatprep.subr.bf16.mxu0 0
        %522 = vmatpush1.bf16.msra.mxu0 0
        %523 = vmatprep.subr.bf16.mxu0 0
        %524 = vmatpush1.bf16.msra.mxu0 0
        %525 = vmatprep.subr.bf16.mxu0 0
        %526 = vmatpush1.bf16.msra.mxu0 0
        %527 = vmatprep.subr.bf16.mxu0 0
        %528 = vmatpush1.bf16.msra.mxu0 0
        %529 = vmatprep.subr.bf16.mxu0 0
        %530 = vmatpush1.bf16.msra.mxu0 0
        %531 = vmatprep.subr.bf16.mxu0 0
        %532 = vmatpush1.bf16.msra.mxu0 0
        %533 = vmatprep.subr.bf16.mxu0 0
        %534 = vmatpush1.bf16.msra.mxu0 0
        %535 = vmatprep.subr.bf16.mxu0 0
        %536 = vmatpush1.bf16.msra.mxu0 0
        %537 = vmatprep.subr.bf16.mxu0 0
        %538 = vmatpush1.bf16.msra.mxu0 0
        %539 = vmatprep.subr.bf16.mxu0 0
        %540 = vmatpush1.bf16.msra.mxu0 0
        %541 = vmatprep.mubr.bf16.mxu0 0
        %542 = vmatmul.mubr.bf16.gmra.mrb[0].mxu0 %v504
        %v543 = vpop.f32.mrb[0].mxu0
        %v544 = vadd.f32 %v501, %v543
        %v545 = vpop.f32.mrb[0].mxu0
        %v546 = vpop.f32.mrb[0].mxu0
        %v547 = vpop.f32.mrb[0].mxu0
        %548 = vdwg.mxu0
        %550 = vset.pattern.permute.xlu0 0
        %551 = vperm.xlu0 %550, %v426
        %v552 = vpop.permute.xlu0 %551
        %v555 = vsel %vm446, %v425, 0
        %557 = vmatprep.subr.bf16.mxu0 %v455
        %558 = vmatpush1.bf16.msra.mxu0 %v452
        %559 = vmatprep.subr.bf16.mxu0 0
        %560 = vmatpush1.bf16.msra.mxu0 0
        %561 = vmatprep.subr.bf16.mxu0 0
        %562 = vmatpush1.bf16.msra.mxu0 0
        %563 = vmatprep.subr.bf16.mxu0 0
        %564 = vmatpush1.bf16.msra.mxu0 0
        %565 = vmatprep.subr.bf16.mxu0 0
        %566 = vmatpush1.bf16.msra.mxu0 0
        %567 = vmatprep.subr.bf16.mxu0 0
        %568 = vmatpush1.bf16.msra.mxu0 0
        %569 = vmatprep.subr.bf16.mxu0 0
        %570 = vmatpush1.bf16.msra.mxu0 0
        %571 = vmatprep.subr.bf16.mxu0 0
        %572 = vmatpush1.bf16.msra.mxu0 0
        %573 = vmatprep.subr.bf16.mxu0 0
        %574 = vmatpush1.bf16.msra.mxu0 0
        %575 = vmatprep.subr.bf16.mxu0 0
        %576 = vmatpush1.bf16.msra.mxu0 0
        %577 = vmatprep.subr.bf16.mxu0 0
        %578 = vmatpush1.bf16.msra.mxu0 0
        %579 = vmatprep.subr.bf16.mxu0 0
        %580 = vmatpush1.bf16.msra.mxu0 0
        %581 = vmatprep.subr.bf16.mxu0 0
        %582 = vmatpush1.bf16.msra.mxu0 0
        %583 = vmatprep.subr.bf16.mxu0 0
        %584 = vmatpush1.bf16.msra.mxu0 0
        %585 = vmatprep.subr.bf16.mxu0 0
        %586 = vmatpush1.bf16.msra.mxu0 0
        %587 = vmatprep.subr.bf16.mxu0 0
        %588 = vmatpush1.bf16.msra.mxu0 0
        %589 = vmatprep.mubr.bf16.mxu0 0
        %590 = vmatmul.mubr.bf16.gmra.mrb[0].mxu0 %v555
        %v591 = vpop.f32.mrb[0].mxu0
        %v592 = vadd.f32 %v552, %v591
        %v593 = vpop.f32.mrb[0].mxu0
        %v594 = vadd.f32 %v552, %v593
        %v595 = vpop.f32.mrb[0].mxu0
        %v596 = vpop.f32.mrb[0].mxu0
        %597 = vdwg.mxu0
        %v598 = vmax.f32 %v592, 0.0
        %v599 = vmax.f32 %v594, 0.0
        %600 = vmatprep.subr.bf16.mxu0 0
        %601 = vmatpush1.bf16.msra.mxu0 %v507
        %602 = vmatprep.subr.bf16.mxu0 0
        %603 = vmatpush1.bf16.msra.mxu0 0
        %604 = vmatprep.subr.bf16.mxu0 0
        %605 = vmatpush1.bf16.msra.mxu0 0
        %606 = vmatprep.subr.bf16.mxu0 0
        %607 = vmatpush1.bf16.msra.mxu0 0
        %608 = vmatprep.subr.bf16.mxu0 0
        %609 = vmatpush1.bf16.msra.mxu0 0
        %610 = vmatprep.subr.bf16.mxu0 0
        %611 = vmatpush1.bf16.msra.mxu0 0
        %612 = vmatprep.subr.bf16.mxu0 0
        %613 = vmatpush1.bf16.msra.mxu0 0
        %614 = vmatprep.subr.bf16.mxu0 0
        %615 = vmatpush1.bf16.msra.mxu0 0
        %616 = vmatprep.subr.bf16.mxu0 0
        %617 = vmatpush1.bf16.msra.mxu0 0
        %618 = vmatprep.subr.bf16.mxu0 0
        %619 = vmatpush1.bf16.msra.mxu0 0
        %620 = vmatprep.subr.bf16.mxu0 0
        %621 = vmatpush1.bf16.msra.mxu0 0
        %622 = vmatprep.subr.bf16.mxu0 0
        %623 = vmatpush1.bf16.msra.mxu0 0
        %624 = vmatprep.subr.bf16.mxu0 0
        %625 = vmatpush1.bf16.msra.mxu0 0
        %626 = vmatprep.subr.bf16.mxu0 0
        %627 = vmatpush1.bf16.msra.mxu0 0
        %628 = vmatprep.subr.bf16.mxu0 0
        %629 = vmatpush1.bf16.msra.mxu0 0
        %630 = vmatprep.subr.bf16.mxu0 0
        %631 = vmatpush1.bf16.msra.mxu0 0
        %632 = vmatprep.mubr.bf16.mxu0 0
        %633 = vmatmul.mubr.bf16.gmra.mrb[0].mxu0 %v555
        %v634 = vpop.f32.mrb[0].mxu0
        %v635 = vadd.f32 %v552, %v634
        %v636 = vpop.f32.mrb[0].mxu0
        %v637 = vpop.f32.mrb[0].mxu0
        %v638 = vpop.f32.mrb[0].mxu0
        %639 = vdwg.mxu0
        %v640 = vmax.f32 %v635, 0.0
        %v641 = vpack.c.bf16 %v544, %v544
        %v642 = vpack.c.bf16 %v492, %v492
        %v643 = vpack.c.bf16 %v494, %v494
        %644 = vxpose.xlu0.c.b16.start [1/8] %v641, 128
        %645 = vxpose.xlu0.c.b16.cont [2/8] 0, 128
        %646 = vxpose.xlu0.c.b16.cont [3/8] 0, 128
        %647 = vxpose.xlu0.c.b16.cont [4/8] 0, 128
        %648 = vxpose.xlu0.c.b16.cont [5/8] 0, 128
        %649 = vxpose.xlu0.c.b16.cont [6/8] 0, 128
        %650 = vxpose.xlu0.c.b16.cont [7/8] 0, 128
        %651 = vxpose.xlu0.c.b16.end [8/8] 0, 128
        %v652 = vpop.trf.xlu0
        %v653 = vpop.trf.xlu0
        %v654 = vpop.trf.xlu0
        %v655 = vpop.trf.xlu0
        %v656 = vpop.trf.xlu0
        %v657 = vpop.trf.xlu0
        %v658 = vpop.trf.xlu0
        %v659 = vpop.trf.xlu0
        %v661 = vsel %vm446, %v652, 0
        %v664 = vsel %vm446, %v653, 0
        %v667 = vsel %vm446, %v654, 0
        %v670 = vsel %vm446, %v655, 0
        %v673 = vsel %vm450, %v642, 0
        %v676 = vsel %vm450, %v643, 0
        %678 = vmatprep.subr.bf16.mxu0 %v676
        %679 = vmatpush1.bf16.msra.mxu0 %v673
        %680 = vmatprep.subr.bf16.mxu0 0
        %681 = vmatpush1.bf16.msra.mxu0 0
        %682 = vmatprep.subr.bf16.mxu0 0
        %683 = vmatpush1.bf16.msra.mxu0 0
        %684 = vmatprep.subr.bf16.mxu0 0
        %685 = vmatpush1.bf16.msra.mxu0 0
        %686 = vmatprep.subr.bf16.mxu0 0
        %687 = vmatpush1.bf16.msra.mxu0 0
        %688 = vmatprep.subr.bf16.mxu0 0
        %689 = vmatpush1.bf16.msra.mxu0 0
        %690 = vmatprep.subr.bf16.mxu0 0
        %691 = vmatpush1.bf16.msra.mxu0 0
        %692 = vmatprep.subr.bf16.mxu0 0
        %693 = vmatpush1.bf16.msra.mxu0 0
        %694 = vmatprep.subr.bf16.mxu0 0
        %695 = vmatpush1.bf16.msra.mxu0 0
        %696 = vmatprep.subr.bf16.mxu0 0
        %697 = vmatpush1.bf16.msra.mxu0 0
        %698 = vmatprep.subr.bf16.mxu0 0
        %699 = vmatpush1.bf16.msra.mxu0 0
        %700 = vmatprep.subr.bf16.mxu0 0
        %701 = vmatpush1.bf16.msra.mxu0 0
        %702 = vmatprep.subr.bf16.mxu0 0
        %703 = vmatpush1.bf16.msra.mxu0 0
        %704 = vmatprep.subr.bf16.mxu0 0
        %705 = vmatpush1.bf16.msra.mxu0 0
        %706 = vmatprep.subr.bf16.mxu0 0
        %707 = vmatpush1.bf16.msra.mxu0 0
        %708 = vmatprep.subr.bf16.mxu0 0
        %709 = vmatpush1.bf16.msra.mxu0 0
        %710 = vmatprep.mubr.bf16.mxu0 0
        %711 = vmatmul.mubr.bf16.gmra.mrb[0].mxu0 %v661
        %v712 = vpop.f32.mrb[0].mxu0
        %v713 = vadd.f32 0.0, %v712
        %v714 = vpop.f32.mrb[0].mxu0
        %v715 = vadd.f32 0.0, %v714
        %v716 = vpop.f32.mrb[0].mxu0
        %v717 = vadd.f32 0.0, %v716
        %v718 = vpop.f32.mrb[0].mxu0
        %v719 = vadd.f32 0.0, %v718
        %720 = vmatprep.mubr.bf16.mxu0 0
        %721 = vmatmul.mubr.bf16.gmra.mrb[0].mxu0 %v664
        %v722 = vpop.f32.mrb[0].mxu0
        %v723 = vadd.f32 0.0, %v722
        %v724 = vpop.f32.mrb[0].mxu0
        %v725 = vadd.f32 0.0, %v724
        %v726 = vpop.f32.mrb[0].mxu0
        %v727 = vadd.f32 0.0, %v726
        %v728 = vpop.f32.mrb[0].mxu0
        %v729 = vadd.f32 0.0, %v728
        %730 = vmatprep.mubr.bf16.mxu0 0
        %731 = vmatmul.mubr.bf16.gmra.mrb[0].mxu0 %v667
        %v732 = vpop.f32.mrb[0].mxu0
        %v733 = vadd.f32 0.0, %v732
        %v734 = vpop.f32.mrb[0].mxu0
        %v735 = vadd.f32 0.0, %v734
        %v736 = vpop.f32.mrb[0].mxu0
        %v737 = vadd.f32 0.0, %v736
        %v738 = vpop.f32.mrb[0].mxu0
        %v739 = vadd.f32 0.0, %v738
        %740 = vmatprep.mubr.bf16.mxu0 0
        %741 = vmatmul.mubr.bf16.gmra.mrb[0].mxu0 %v670
        %v742 = vpop.f32.mrb[0].mxu0
        %v743 = vadd.f32 0.0, %v742
        %v744 = vpop.f32.mrb[0].mxu0
        %v745 = vadd.f32 0.0, %v744
        %v746 = vpop.f32.mrb[0].mxu0
        %v747 = vadd.f32 0.0, %v746
        %v748 = vpop.f32.mrb[0].mxu0
        %v749 = vadd.f32 0.0, %v748
        %750 = vdwg.mxu0
        %v751 = vmax.f32 %v713, %v723
        %v752 = vmax.f32 %v717, %v727
        %v753 = vmax.f32 %v751, %v733
        %v754 = vmax.f32 %v752, %v737
        %v755 = vmax.f32 %v753, %v743
        %v756 = vmax.f32 %v754, %v747
        %v757 = vmax.f32 %v755, %v756
        %v758 = vrot.slane %v757, 4
        %v759 = vmax.f32 %v757, %v758
        %v760 = vrot.slane %v759, 2
        %v761 = vmax.f32 %v759, %v760
        %v762 = vrot.slane %v761, 1
        %v763 = vmax.f32 %v761, %v762
        %v764 = vmax.f32 %v715, %v725
        %v765 = vmax.f32 %v719, %v729
        %v766 = vmax.f32 %v764, %v735
        %v767 = vmax.f32 %v765, %v739
        %v768 = vmax.f32 %v766, %v745
        %v769 = vmax.f32 %v767, %v749
        %v770 = vmax.f32 %v768, %v769
        %v771 = vrot.slane %v770, 4
        %v772 = vmax.f32 %v770, %v771
        %v773 = vrot.slane %v772, 2
        %v774 = vmax.f32 %v772, %v773
        %v775 = vrot.slane %v774, 1
        %v776 = vmax.f32 %v774, %v775
        %v777 = vsub.f32 %v713, %v763
        %v778 = vsub.f32 %v715, %v776
        %v779 = vsub.f32 %v717, %v763
        %v780 = vsub.f32 %v719, %v776
        %v781 = vsub.f32 %v723, %v763
        %v782 = vsub.f32 %v725, %v776
        %v783 = vsub.f32 %v727, %v763
        %v784 = vsub.f32 %v729, %v776
        %v785 = vsub.f32 %v733, %v763
        %v786 = vsub.f32 %v735, %v776
        %v787 = vsub.f32 %v737, %v763
        %v788 = vsub.f32 %v739, %v776
        %v789 = vsub.f32 %v743, %v763
        %v790 = vsub.f32 %v745, %v776
        %v791 = vsub.f32 %v747, %v763
        %v792 = vsub.f32 %v749, %v776
        %v793 = vmul.f32 %v777, 1.442695
        %v794 = vpow.pop %v793
        %v795 = vmul.f32 %v778, 1.442695
        %v796 = vpow.pop %v795
        %v797 = vmul.f32 %v779, 1.442695
        %v798 = vpow.pop %v797
        %v799 = vmul.f32 %v780, 1.442695
        %v800 = vpow.pop %v799
        %v801 = vmul.f32 %v781, 1.442695
        %v802 = vpow.pop %v801
        %v803 = vmul.f32 %v782, 1.442695
        %v804 = vpow.pop %v803
        %v805 = vmul.f32 %v783, 1.442695
        %v806 = vpow.pop %v805
        %v807 = vmul.f32 %v784, 1.442695
        %v808 = vpow.pop %v807
        %v809 = vmul.f32 %v785, 1.442695
        %v810 = vpow.pop %v809
        %v811 = vmul.f32 %v786, 1.442695
        %v812 = vpow.pop %v811
        %v813 = vmul.f32 %v787, 1.442695
        %v814 = vpow.pop %v813
        %v815 = vmul.f32 %v788, 1.442695
        %v816 = vpow.pop %v815
        %v817 = vmul.f32 %v789, 1.442695
        %v818 = vpow.pop %v817
        %v819 = vmul.f32 %v790, 1.442695
        %v820 = vpow.pop %v819
        %v821 = vmul.f32 %v791, 1.442695
        %v822 = vpow.pop %v821
        %v823 = vmul.f32 %v792, 1.442695
        %v824 = vpow.pop %v823
        %v825 = vadd.f32 %v794, %v798
        %v826 = vadd.f32 %v825, %v802
        %v827 = vadd.f32 %v826, %v806
        %v828 = vadd.f32 %v827, %v810
        %v829 = vadd.f32 %v828, %v814
        %v830 = vadd.f32 %v829, %v818
        %v831 = vadd.f32 %v830, %v822
        %v832 = vrot.slane %v831, 4
        %v833 = vadd.f32 %v831, %v832
        %v834 = vrot.slane %v833, 2
        %v835 = vadd.f32 %v833, %v834
        %v836 = vrot.slane %v835, 1
        %v837 = vadd.f32 %v835, %v836
        %v838 = vadd.f32 %v796, %v800
        %v839 = vadd.f32 %v838, %v804
        %v840 = vadd.f32 %v839, %v808
        %v841 = vadd.f32 %v840, %v812
        %v842 = vadd.f32 %v841, %v816
        %v843 = vadd.f32 %v842, %v820
        %v844 = vadd.f32 %v843, %v824
        %v845 = vrot.slane %v844, 4
        %v846 = vadd.f32 %v844, %v845
        %v847 = vrot.slane %v846, 2
        %v848 = vadd.f32 %v846, %v847
        %v849 = vrot.slane %v848, 1
        %v850 = vadd.f32 %v848, %v849
        %v851 = vrcp.pop %v837
        %v852 = vrcp.pop %v850
        %v853 = vpack.c.bf16 %v640, %v640
        %v854 = vpack.c.bf16 %v798, %v794
        %v855 = vpack.c.bf16 %v800, %v796
        %v856 = vpack.c.bf16 %v806, %v802
        %v857 = vpack.c.bf16 %v808, %v804
        %v858 = vpack.c.bf16 %v814, %v810
        %v859 = vpack.c.bf16 %v816, %v812
        %v860 = vpack.c.bf16 %v822, %v818
        %v861 = vpack.c.bf16 %v824, %v820
        %vm862 = vcmask 523264
        %v864 = vsel %vm862, %v853, 0
        %866 = vmatprep.subr.bf16.mxu0 %v855
        %867 = vmatpush1.bf16.msra.mxu0 %v854
        %868 = vmatprep.subr.bf16.mxu0 %v857
        %869 = vmatpush1.bf16.msra.mxu0 %v856
        %870 = vmatprep.subr.bf16.mxu0 %v859
        %871 = vmatpush1.bf16.msra.mxu0 %v858
        %872 = vmatprep.subr.bf16.mxu0 %v861
        %873 = vmatpush1.bf16.msra.mxu0 %v860
        %874 = vmatprep.subr.bf16.mxu0 0
        %875 = vmatpush1.bf16.msra.mxu0 0
        %876 = vmatprep.subr.bf16.mxu0 0
        %877 = vmatpush1.bf16.msra.mxu0 0
        %878 = vmatprep.subr.bf16.mxu0 0
        %879 = vmatpush1.bf16.msra.mxu0 0
        %880 = vmatprep.subr.bf16.mxu0 0
        %881 = vmatpush1.bf16.msra.mxu0 0
        %882 = vmatprep.subr.bf16.mxu0 0
        %883 = vmatpush1.bf16.msra.mxu0 0
        %884 = vmatprep.subr.bf16.mxu0 0
        %885 = vmatpush1.bf16.msra.mxu0 0
        %886 = vmatprep.subr.bf16.mxu0 0
        %887 = vmatpush1.bf16.msra.mxu0 0
        %888 = vmatprep.subr.bf16.mxu0 0
        %889 = vmatpush1.bf16.msra.mxu0 0
        %890 = vmatprep.subr.bf16.mxu0 0
        %891 = vmatpush1.bf16.msra.mxu0 0
        %892 = vmatprep.subr.bf16.mxu0 0
        %893 = vmatpush1.bf16.msra.mxu0 0
        %894 = vmatprep.subr.bf16.mxu0 0
        %895 = vmatpush1.bf16.msra.mxu0 0
        %896 = vmatprep.subr.bf16.mxu0 0
        %897 = vmatpush1.bf16.msra.mxu0 0
        %898 = vmatprep.mubr.bf16.mxu0 0
        %899 = vmatmul.mubr.bf16.gmra.mrb[0].mxu0 %v864
        %v900 = vpop.f32.mrb[0].mxu0
        %v901 = vadd.f32 0.0, %v900
        %v902 = vpop.f32.mrb[0].mxu0
        %v903 = vadd.f32 0.0, %v902
        %v904 = vpop.f32.mrb[0].mxu0
        %v905 = vpop.f32.mrb[0].mxu0
        %906 = vdwg.mxu0
        %v907 = vpack.c.bf16 %v901, %v901
        %v908 = vpack.c.bf16 %v903, %v903
        %v910 = vsel %vm446, %v427, 0
        %v913 = vsel %vm450, %v907, 0
        %v916 = vsel %vm450, %v908, 0
        %918 = vmatprep.subr.bf16.mxu0 %v916
        %919 = vmatpush1.bf16.msra.mxu0 %v913
        %920 = vmatprep.subr.bf16.mxu0 0
        %921 = vmatpush1.bf16.msra.mxu0 0
        %922 = vmatprep.subr.bf16.mxu0 0
        %923 = vmatpush1.bf16.msra.mxu0 0
        %924 = vmatprep.subr.bf16.mxu0 0
        %925 = vmatpush1.bf16.msra.mxu0 0
        %926 = vmatprep.subr.bf16.mxu0 0
        %927 = vmatpush1.bf16.msra.mxu0 0
        %928 = vmatprep.subr.bf16.mxu0 0
        %929 = vmatpush1.bf16.msra.mxu0 0
        %930 = vmatprep.subr.bf16.mxu0 0
        %931 = vmatpush1.bf16.msra.mxu0 0
        %932 = vmatprep.subr.bf16.mxu0 0
        %933 = vmatpush1.bf16.msra.mxu0 0
        %934 = vmatprep.subr.bf16.mxu0 0
        %935 = vmatpush1.bf16.msra.mxu0 0
        %936 = vmatprep.subr.bf16.mxu0 0
        %937 = vmatpush1.bf16.msra.mxu0 0
        %938 = vmatprep.subr.bf16.mxu0 0
        %939 = vmatpush1.bf16.msra.mxu0 0
        %940 = vmatprep.subr.bf16.mxu0 0
        %941 = vmatpush1.bf16.msra.mxu0 0
        %942 = vmatprep.subr.bf16.mxu0 0
        %943 = vmatpush1.bf16.msra.mxu0 0
        %944 = vmatprep.subr.bf16.mxu0 0
        %945 = vmatpush1.bf16.msra.mxu0 0
        %946 = vmatprep.subr.bf16.mxu0 0
        %947 = vmatpush1.bf16.msra.mxu0 0
        %948 = vmatprep.subr.bf16.mxu0 0
        %949 = vmatpush1.bf16.msra.mxu0 0
        %950 = vmatprep.mubr.bf16.mxu0 0
        %951 = vmatmul.mubr.bf16.gmra.mrb[0].mxu0 %v910
        %v952 = vpop.f32.mrb[0].mxu0
        %v953 = vadd.f32 0.0, %v952
        %v954 = vpop.f32.mrb[0].mxu0
        %v955 = vadd.f32 0.0, %v954
        %v956 = vpop.f32.mrb[0].mxu0
        %v957 = vpop.f32.mrb[0].mxu0
        %958 = vdwg.mxu0
        %v959 = vmul.f32 %v953, %v851
        %v960 = vmul.f32 %v955, %v852
        %v961 = vpack.c.bf16 %v598, %v598
        %v962 = vpack.c.bf16 %v599, %v599
        %v964 = vsel %vm446, %v428, 0
        %v967 = vsel %vm450, %v961, 0
        %v970 = vsel %vm450, %v962, 0
        %972 = vmatprep.subr.bf16.mxu0 %v970
        %973 = vmatpush1.bf16.msra.mxu0 %v967
        %974 = vmatprep.subr.bf16.mxu0 0
        %975 = vmatpush1.bf16.msra.mxu0 0
        %976 = vmatprep.subr.bf16.mxu0 0
        %977 = vmatpush1.bf16.msra.mxu0 0
        %978 = vmatprep.subr.bf16.mxu0 0
        %979 = vmatpush1.bf16.msra.mxu0 0
        %980 = vmatprep.subr.bf16.mxu0 0
        %981 = vmatpush1.bf16.msra.mxu0 0
        %982 = vmatprep.subr.bf16.mxu0 0
        %983 = vmatpush1.bf16.msra.mxu0 0
        %984 = vmatprep.subr.bf16.mxu0 0
        %985 = vmatpush1.bf16.msra.mxu0 0
        %986 = vmatprep.subr.bf16.mxu0 0
        %987 = vmatpush1.bf16.msra.mxu0 0
        %988 = vmatprep.subr.bf16.mxu0 0
        %989 = vmatpush1.bf16.msra.mxu0 0
        %990 = vmatprep.subr.bf16.mxu0 0
        %991 = vmatpush1.bf16.msra.mxu0 0
        %992 = vmatprep.subr.bf16.mxu0 0
        %993 = vmatpush1.bf16.msra.mxu0 0
        %994 = vmatprep.subr.bf16.mxu0 0
        %995 = vmatpush1.bf16.msra.mxu0 0
        %996 = vmatprep.subr.bf16.mxu0 0
        %997 = vmatpush1.bf16.msra.mxu0 0
        %998 = vmatprep.subr.bf16.mxu0 0
        %999 = vmatpush1.bf16.msra.mxu0 0
        %1000 = vmatprep.subr.bf16.mxu0 0
        %1001 = vmatpush1.bf16.msra.mxu0 0
        %1002 = vmatprep.subr.bf16.mxu0 0
        %1003 = vmatpush1.bf16.msra.mxu0 0
        %1004 = vmatprep.mubr.bf16.mxu0 0
        %1005 = vmatmul.mubr.bf16.gmra.mrb[0].mxu0 %v964
        %v1006 = vpop.f32.mrb[0].mxu0
        %v1007 = vadd.f32 0.0, %v1006
        %v1008 = vpop.f32.mrb[0].mxu0
        %v1009 = vadd.f32 0.0, %v1008
        %v1010 = vpop.f32.mrb[0].mxu0
        %v1011 = vpop.f32.mrb[0].mxu0
        %1012 = vdwg.mxu0
        %v1013 = vadd.f32 %v959, %v1007
        %v1014 = vadd.f32 %v960, %v1009
        %1016 = vset.pattern.permute.xlu0 0
        %1017 = vperm.xlu0 %1016, %v429
        %v1018 = vpop.permute.xlu0 %1017
        %v1020 = vadd.f32 %v1013, %v1018
        %v1021 = vadd.f32 %v1014, %v1018
        %v1022 = vmax.f32 %v1020, 0.0
        %v1023 = vmax.f32 %v1021, 0.0
        %1024 = vst [vmem:[%s415] sm:$0xff] %v1022
        %1025 = vst [vmem:[%s415 + $0x8] sm:$0xff] %v1023
        %s1026 = sand.u32 %s277, 1
        %s1027 = scalar_lea.sflag [#allocation4], %s1026
        %s1028 = sand.u32 %s277, 1
        %s1029 = smul.addr %s1028, 16
        %s1030 = scalar_lea.vmem [#allocation5], %s1029
        // Predicated region
        $region69: #{tpu_custom_call.1} parent=63 // pred_check
          %p1031 = pneg %p287
        $region70: #{tpu_custom_call.1} parent=63 // pred_check_branch
          %1033 = sbr.rel (%p1031) target = $region72
        $region71: #{tpu_custom_call.1} parent=63 // pred_region
          %s1035 = ssub.s32 256, 256
          %1036 = vsyncadd %s1027, %s1035
          %s1037 = smul.addr %s28, 2
          %s1038 = smul.addr %s1037, 128
          %s1039 = scalar_lea.hbm %s11, %s1038
          %s1041 = sshll.u32 %s1030, 4
          %s1042 = int_to_ptr.vmem [resolvable:$true] %s1041
          %1044 = dma.vmem_to_hbm [thread:$0]  %s1042, 256, %s1039, %s1027
        $region72: #{tpu_custom_call.1} parent=63 // pred_fallthru
          _
      $region64: #{tpu_custom_call.1} parent=5 // pred_fallthru
        _
      %p1045 = scmp.le.s32.totalorder 2, %s23
      // Predicated region
      $region73: #{tpu_custom_call.1} parent=5 // pred_check
        %p1046 = pneg %p1045
      $region74: #{tpu_custom_call.1} parent=5 // pred_check_branch
        %1048 = sbr.rel (%p1046) target = $region76
      $region75: #{tpu_custom_call.1} parent=5 // pred_region
        %s1049 = ssub.s32 %s23, 2
        // Predicated region
        $region77: #{tpu_custom_call.1} parent=75 // pred_check
          %p1050 = pneg %p293
        $region78: #{tpu_custom_call.1} parent=75 // pred_check_branch
          %1052 = sbr.rel (%p1050) target = $region80
        $region79: #{tpu_custom_call.1} parent=75 // pred_region
          %s1053 = sand.u32 %s278, 1
          %s1054 = scalar_lea.sflag [#allocation4], %s1053
          %s1055 = sand.u32 %s278, 1
          %s1056 = smul.addr %s1055, 16
          %s1057 = scalar_lea.vmem [#allocation5], %s1056
          %1058 = dma.done %s1054, 256
        $region80: #{tpu_custom_call.1} parent=75 // pred_fallthru
          _
      $region76: #{tpu_custom_call.1} parent=5 // pred_fallthru
        _
    $region6: #{tpu_custom_call.1} parent=1 // loop_footer
      %s27 = sadd.s32 1, %s23
    $region7: #{tpu_custom_call.1} parent=1 // loop_footer_branch
      %22 = sbr.rel target = $region3
    $region8: #{tpu_custom_call.1} parent=1 // loop_exit
      _
    %1059 = vsyncpa [#allocation3], 1
    %s1060 = scalar_lea.sflag [#allocation3], 1
    %1061 = vsyncpa %s1060, 1
    %1062 = vsyncpa [#allocation4], 1
    %s1063 = scalar_lea.sflag [#allocation4], 1
    %1064 = vsyncpa %s1063, 1

// kernel: tpu_custom_call.1
$region0: #{tpu_custom_call.1}
  #allocation0 [shape = 'u32[]', space=smem, size = 0x4, offset = 0x4, fixed_abs, tag = 'smem constant byte address 0x4 - core index']
  #allocation1 [shape = 'u32[144,128]{1,0:T(1,128)}', space=vmem, size = 0x12000, scoped, tag = 'internal scratch']
  %s0 = inlined_call_operand.vmem [shape: bf16[4,4,64], index: 0, kind: input, shape index: {}]
  %s1 = inlined_call_operand.hbm [shape: bf16[4,4,256], index: 1, kind: input, shape index: {}]
  %s2 = inlined_call_operand.vmem [shape: bf16[4,4], index: 2, kind: input, shape index: {}]
  %s3 = inlined_call_operand.vmem [shape: f32[4,1], index: 3, kind: input, shape index: {}]
  %s4 = inlined_call_operand.vmem [shape: bf16[4,4], index: 4, kind: input, shape index: {}]
  %s5 = inlined_call_operand.vmem [shape: f32[4,1], index: 5, kind: input, shape index: {}]
  %s6 = inlined_call_operand.vmem [shape: bf16[4,4], index: 6, kind: input, shape index: {}]
  %s7 = inlined_call_operand.vmem [shape: f32[4,1], index: 7, kind: input, shape index: {}]
  %s8 = inlined_call_operand.vmem [shape: bf16[8,4], index: 8, kind: input, shape index: {}]
  %s9 = inlined_call_operand.vmem [shape: bf16[8,4], index: 9, kind: input, shape index: {}]
  %s10 = inlined_call_operand.vmem [shape: f32[8,1], index: 10, kind: input, shape index: {}]
  %s11 = inlined_call_operand.hbm [shape: f32[4,8,256], index: 11, kind: output, shape index: {}]
  %s12 = sld [smem:[#allocation0]]
  $region81: #{tpu_custom_call.1} parent=0
    _
  %s14 = ssub.s32 1, %s12
  %s15 = scalar_select 0, %s14, %s12
  $region1: #{tpu_custom_call.1} parent=0
    #allocation2 [shape = 'u8[4096]{0}', space=vmem, size = 0x1000, scoped, tag = 'input window, operand 1']
    #allocation3 [shape = 's32[2]{0}', space=sflag, size = 0x8, scoped, tag = 'scoped memory for tpu_custom_call.1']
    #allocation4 [shape = 's32[2]{0}', space=sflag, size = 0x8, scoped, tag = 'scoped memory for tpu_custom_call.1']
    #allocation5 [shape = 'u8[16384]{0}', space=vmem, size = 0x4000, scoped, tag = 'output window, operand 0']
    %16 = vsyncpa [#allocation3], 0
    %s17 = scalar_lea.sflag [#allocation3], 1
    %18 = vsyncpa %s17, 0
    %19 = vsyncpa [#allocation4], 0
    %s20 = scalar_lea.sflag [#allocation4], 1
    %21 = vsyncpa %s20, 0
    loop: start=0, step=1, limit=6
    $region2: #{tpu_custom_call.1} parent=1 // loop_pre_header
      _
    $region3: #{tpu_custom_call.1} parent=1 // loop_header
      %s23 = sphi 0, %s27
      %p24 = scmp.ge.s32.totalorder %s23, 6
      %s33 = sphi 0, %s35
      %s36 = sphi 0, %s33
      %s37 = sphi 0, %s36
      %s53 = sphi 0, %s37
      %s59 = sphi 0, %s61
      %s62 = sphi 0, %s59
      %s63 = sphi 0, %s62
      %s79 = sphi 0, %s63
      %s83 = sphi 0, %s83
      %s85 = sphi 0, %s83
      %s86 = sphi 0, %s85
      %s100 = sphi 0, %s86
      %s104 = sphi 0, %s104
      %s106 = sphi 0, %s104
      %s107 = sphi 0, %s106
      %s121 = sphi 0, %s107
      %s125 = sphi 0, %s125
      %s127 = sphi 0, %s125
      %s128 = sphi 0, %s127
      %s142 = sphi 0, %s128
      %s146 = sphi 0, %s146
      %s148 = sphi 0, %s146
      %s149 = sphi 0, %s148
      %s163 = sphi 0, %s149
      %s167 = sphi 0, %s167
      %s169 = sphi 0, %s167
      %s170 = sphi 0, %s169
      %s184 = sphi 0, %s170
      %s188 = sphi 0, %s188
      %s190 = sphi 0, %s188
      %s191 = sphi 0, %s190
      %s205 = sphi 0, %s191
      %s209 = sphi 0, %s209
      %s211 = sphi 0, %s209
      %s212 = sphi 0, %s211
      %s226 = sphi 0, %s212
      %s230 = sphi 0, %s230
      %s232 = sphi 0, %s230
      %s233 = sphi 0, %s232
      %s247 = sphi 0, %s233
      %s251 = sphi 0, %s251
      %s253 = sphi 0, %s251
      %s254 = sphi 0, %s253
      %s268 = sphi 0, %s254
      %s274 = sphi 0, %s276
      %s277 = sphi 0, %s274
      %s278 = sphi 0, %s277
      %s294 = sphi 0, %s278
    $region4: #{tpu_custom_call.1} parent=1 // loop_header_branch
      %26 = sbr.rel (%p24) target = $region8
    $region5: #{tpu_custom_call.1} parent=1 // loop_body
      %s28 = ssub.s32 %s23, 1
      %s29 = ssub.s32 %s23, 2
      %s30 = sadd.s32 %s23, 1
      %s31 = ssub.s32 %s23, %s30
      %p32 = scmp.eq.s32.totalorder %s31, 0
      %s34 = sadd.s32 %s33, 1
      %s35 = scalar_select %p32, %s33, %s34
      %p38 = pneg %p32
      %p39 = scmp.eq.s32.totalorder %s23, 3
      %p40 = por %p38, %p39
      %p41 = scmp.ne.s32.totalorder %s33, %s36
      %p42 = scmp.eq.s32.totalorder %s23, 0
      %p43 = por %p41, %p42
      %p44 = scmp.ne.s32.totalorder %s33, %s36
      %p45 = scmp.eq.s32.totalorder %s28, 3
      %p46 = por %p44, %p45
      %p47 = scmp.ne.s32.totalorder %s36, %s37
      %p48 = scmp.eq.s32.totalorder %s28, 0
      %p49 = por %p47, %p48
      %p50 = scmp.ne.s32.totalorder %s36, %s37
      %p51 = scmp.eq.s32.totalorder %s29, 3
      %p52 = por %p50, %p51
      %p54 = scmp.ne.s32.totalorder %s37, %s53
      %p55 = scmp.eq.s32.totalorder %s29, 0
      %p56 = por %p54, %p55
      %s57 = ssub.s32 %s23, %s30
      %p58 = scmp.eq.s32.totalorder %s57, 0
      %s60 = sadd.s32 %s59, 1
      %s61 = scalar_select %p58, %s59, %s60
      %p64 = pneg %p58
      %p65 = scmp.eq.s32.totalorder %s23, 3
      %p66 = por %p64, %p65
      %p67 = scmp.ne.s32.totalorder %s59, %s62
      %p68 = scmp.eq.s32.totalorder %s23, 0
      %p69 = por %p67, %p68
      %p70 = scmp.ne.s32.totalorder %s59, %s62
      %p71 = scmp.eq.s32.totalorder %s28, 3
      %p72 = por %p70, %p71
      %p73 = scmp.ne.s32.totalorder %s62, %s63
      %p74 = scmp.eq.s32.totalorder %s28, 0
      %p75 = por %p73, %p74
      %p76 = scmp.ne.s32.totalorder %s62, %s63
      %p77 = scmp.eq.s32.totalorder %s29, 3
      %p78 = por %p76, %p77
      %p80 = scmp.ne.s32.totalorder %s63, %s79
      %p81 = scmp.eq.s32.totalorder %s29, 0
      %p82 = por %p80, %p81
      %s84 = sadd.s32 %s83, 1
      %p87 = scmp.eq.s32.totalorder %s23, 3
      %p88 = scmp.ne.s32.totalorder %s83, %s85
      %p89 = scmp.eq.s32.totalorder %s23, 0
      %p90 = por %p88, %p89
      %p91 = scmp.ne.s32.totalorder %s83, %s85
      %p92 = scmp.eq.s32.totalorder %s28, 3
      %p93 = por %p91, %p92
      %p94 = scmp.ne.s32.totalorder %s85, %s86
      %p95 = scmp.eq.s32.totalorder %s28, 0
      %p96 = por %p94, %p95
      %p97 = scmp.ne.s32.totalorder %s85, %s86
      %p98 = scmp.eq.s32.totalorder %s29, 3
      %p99 = por %p97, %p98
      %p101 = scmp.ne.s32.totalorder %s86, %s100
      %p102 = scmp.eq.s32.totalorder %s29, 0
      %p103 = por %p101, %p102
      %s105 = sadd.s32 %s104, 1
      %p108 = scmp.eq.s32.totalorder %s23, 3
      %p109 = scmp.ne.s32.totalorder %s104, %s106
      %p110 = scmp.eq.s32.totalorder %s23, 0
      %p111 = por %p109, %p110
      %p112 = scmp.ne.s32.totalorder %s104, %s106
      %p113 = scmp.eq.s32.totalorder %s28, 3
      %p114 = por %p112, %p113
      %p115 = scmp.ne.s32.totalorder %s106, %s107
      %p116 = scmp.eq.s32.totalorder %s28, 0
      %p117 = por %p115, %p116
      %p118 = scmp.ne.s32.totalorder %s106, %s107
      %p119 = scmp.eq.s32.totalorder %s29, 3
      %p120 = por %p118, %p119
      %p122 = scmp.ne.s32.totalorder %s107, %s121
      %p123 = scmp.eq.s32.totalorder %s29, 0
      %p124 = por %p122, %p123
      %s126 = sadd.s32 %s125, 1
      %p129 = scmp.eq.s32.totalorder %s23, 3
      %p130 = scmp.ne.s32.totalorder %s125, %s127
      %p131 = scmp.eq.s32.totalorder %s23, 0
      %p132 = por %p130, %p131
      %p133 = scmp.ne.s32.totalorder %s125, %s127
      %p134 = scmp.eq.s32.totalorder %s28, 3
      %p135 = por %p133, %p134
      %p136 = scmp.ne.s32.totalorder %s127, %s128
      %p137 = scmp.eq.s32.totalorder %s28, 0
      %p138 = por %p136, %p137
      %p139 = scmp.ne.s32.totalorder %s127, %s128
      %p140 = scmp.eq.s32.totalorder %s29, 3
      %p141 = por %p139, %p140
      %p143 = scmp.ne.s32.totalorder %s128, %s142
      %p144 = scmp.eq.s32.totalorder %s29, 0
      %p145 = por %p143, %p144
      %s147 = sadd.s32 %s146, 1
      %p150 = scmp.eq.s32.totalorder %s23, 3
      %p151 = scmp.ne.s32.totalorder %s146, %s148
      %p152 = scmp.eq.s32.totalorder %s23, 0
      %p153 = por %p151, %p152
      %p154 = scmp.ne.s32.totalorder %s146, %s148
      %p155 = scmp.eq.s32.totalorder %s28, 3
      %p156 = por %p154, %p155
      %p157 = scmp.ne.s32.totalorder %s148, %s149
      %p158 = scmp.eq.s32.totalorder %s28, 0
      %p159 = por %p157, %p158
      %p160 = scmp.ne.s32.totalorder %s148, %s149
      %p161 = scmp.eq.s32.totalorder %s29, 3
      %p162 = por %p160, %p161
      %p164 = scmp.ne.s32.totalorder %s149, %s163
      %p165 = scmp.eq.s32.totalorder %s29, 0
      %p166 = por %p164, %p165
      %s168 = sadd.s32 %s167, 1
      %p171 = scmp.eq.s32.totalorder %s23, 3
      %p172 = scmp.ne.s32.totalorder %s167, %s169
      %p173 = scmp.eq.s32.totalorder %s23, 0
      %p174 = por %p172, %p173
      %p175 = scmp.ne.s32.totalorder %s167, %s169
      %p176 = scmp.eq.s32.totalorder %s28, 3
      %p177 = por %p175, %p176
      %p178 = scmp.ne.s32.totalorder %s169, %s170
      %p179 = scmp.eq.s32.totalorder %s28, 0
      %p180 = por %p178, %p179
      %p181 = scmp.ne.s32.totalorder %s169, %s170
      %p182 = scmp.eq.s32.totalorder %s29, 3
      %p183 = por %p181, %p182
      %p185 = scmp.ne.s32.totalorder %s170, %s184
      %p186 = scmp.eq.s32.totalorder %s29, 0
      %p187 = por %p185, %p186
      %s189 = sadd.s32 %s188, 1
      %p192 = scmp.eq.s32.totalorder %s23, 3
      %p193 = scmp.ne.s32.totalorder %s188, %s190
      %p194 = scmp.eq.s32.totalorder %s23, 0
      %p195 = por %p193, %p194
      %p196 = scmp.ne.s32.totalorder %s188, %s190
      %p197 = scmp.eq.s32.totalorder %s28, 3
      %p198 = por %p196, %p197
      %p199 = scmp.ne.s32.totalorder %s190, %s191
      %p200 = scmp.eq.s32.totalorder %s28, 0
      %p201 = por %p199, %p200
      %p202 = scmp.ne.s32.totalorder %s190, %s191
      %p203 = scmp.eq.s32.totalorder %s29, 3
      %p204 = por %p202, %p203
      %p206 = scmp.ne.s32.totalorder %s191, %s205
      %p207 = scmp.eq.s32.totalorder %s29, 0
      %p208 = por %p206, %p207
      %s210 = sadd.s32 %s209, 1
      %p213 = scmp.eq.s32.totalorder %s23, 3
      %p214 = scmp.ne.s32.totalorder %s209, %s211
      %p215 = scmp.eq.s32.totalorder %s23, 0
      %p216 = por %p214, %p215
      %p217 = scmp.ne.s32.totalorder %s209, %s211
      %p218 = scmp.eq.s32.totalorder %s28, 3
      %p219 = por %p217, %p218
      %p220 = scmp.ne.s32.totalorder %s211, %s212
      %p221 = scmp.eq.s32.totalorder %s28, 0
      %p222 = por %p220, %p221
      %p223 = scmp.ne.s32.totalorder %s211, %s212
      %p224 = scmp.eq.s32.totalorder %s29, 3
      %p225 = por %p223, %p224
      %p227 = scmp.ne.s32.totalorder %s212, %s226
      %p228 = scmp.eq.s32.totalorder %s29, 0
      %p229 = por %p227, %p228
      %s231 = sadd.s32 %s230, 1
      %p234 = scmp.eq.s32.totalorder %s23, 3
      %p235 = scmp.ne.s32.totalorder %s230, %s232
      %p236 = scmp.eq.s32.totalorder %s23, 0
      %p237 = por %p235, %p236
      %p238 = scmp.ne.s32.totalorder %s230, %s232
      %p239 = scmp.eq.s32.totalorder %s28, 3
      %p240 = por %p238, %p239
      %p241 = scmp.ne.s32.totalorder %s232, %s233
      %p242 = scmp.eq.s32.totalorder %s28, 0
      %p243 = por %p241, %p242
      %p244 = scmp.ne.s32.totalorder %s232, %s233
      %p245 = scmp.eq.s32.totalorder %s29, 3
      %p246 = por %p244, %p245
      %p248 = scmp.ne.s32.totalorder %s233, %s247
      %p249 = scmp.eq.s32.totalorder %s29, 0
      %p250 = por %p248, %p249
      %s252 = sadd.s32 %s251, 1
      %p255 = scmp.eq.s32.totalorder %s23, 3
      %p256 = scmp.ne.s32.totalorder %s251, %s253
      %p257 = scmp.eq.s32.totalorder %s23, 0
      %p258 = por %p256, %p257
      %p259 = scmp.ne.s32.totalorder %s251, %s253
      %p260 = scmp.eq.s32.totalorder %s28, 3
      %p261 = por %p259, %p260
      %p262 = scmp.ne.s32.totalorder %s253, %s254
      %p263 = scmp.eq.s32.totalorder %s28, 0
      %p264 = por %p262, %p263
      %p265 = scmp.ne.s32.totalorder %s253, %s254
      %p266 = scmp.eq.s32.totalorder %s29, 3
      %p267 = por %p265, %p266
      %p269 = scmp.ne.s32.totalorder %s254, %s268
      %p270 = scmp.eq.s32.totalorder %s29, 0
      %p271 = por %p269, %p270
      %s272 = ssub.s32 %s23, %s30
      %p273 = scmp.eq.s32.totalorder %s272, 0
      %s275 = sadd.s32 %s274, 1
      %s276 = scalar_select %p273, %s274, %s275
      %p279 = pneg %p273
      %p280 = scmp.eq.s32.totalorder %s23, 3
      %p281 = por %p279, %p280
      %p282 = scmp.ne.s32.totalorder %s274, %s277
      %p283 = scmp.eq.s32.totalorder %s23, 0
      %p284 = por %p282, %p283
      %p285 = scmp.ne.s32.totalorder %s274, %s277
      %p286 = scmp.eq.s32.totalorder %s28, 3
      %p287 = por %p285, %p286
      %p288 = scmp.ne.s32.totalorder %s277, %s278
      %p289 = scmp.eq.s32.totalorder %s28, 0
      %p290 = por %p288, %p289
      %p291 = scmp.ne.s32.totalorder %s277, %s278
      %p292 = scmp.eq.s32.totalorder %s29, 3
      %p293 = por %p291, %p292
      %p295 = scmp.ne.s32.totalorder %s278, %s294
      %p296 = scmp.eq.s32.totalorder %s29, 0
      %p297 = por %p295, %p296
      %p298 = scmp.le.s32.totalorder 1, %s23
      %p299 = scmp.lt.s32.totalorder %s23, 5
      %p300 = pnand %p298, %p299
      %p301 = pneg %p300
      // Predicated region
      $region9: #{tpu_custom_call.1} parent=5 // pred_check
        _
      $region10: #{tpu_custom_call.1} parent=5 // pred_check_branch
        %303 = sbr.rel (%p300) target = $region12
      $region11: #{tpu_custom_call.1} parent=5 // pred_region
        %s304 = ssub.s32 %s23, 1
        // Predicated region
        $region13: #{tpu_custom_call.1} parent=11 // pred_check
          %p305 = pneg %p96
        $region14: #{tpu_custom_call.1} parent=11 // pred_check_branch
          %307 = sbr.rel (%p305) target = $region16
        $region15: #{tpu_custom_call.1} parent=11 // pred_region
          _
        $region16: #{tpu_custom_call.1} parent=11 // pred_fallthru
          _
        // Predicated region
        $region17: #{tpu_custom_call.1} parent=11 // pred_check
          %p308 = pneg %p117
        $region18: #{tpu_custom_call.1} parent=11 // pred_check_branch
          %310 = sbr.rel (%p308) target = $region20
        $region19: #{tpu_custom_call.1} parent=11 // pred_region
          _
        $region20: #{tpu_custom_call.1} parent=11 // pred_fallthru
          _
        // Predicated region
        $region21: #{tpu_custom_call.1} parent=11 // pred_check
          %p311 = pneg %p138
        $region22: #{tpu_custom_call.1} parent=11 // pred_check_branch
          %313 = sbr.rel (%p311) target = $region24
        $region23: #{tpu_custom_call.1} parent=11 // pred_region
          _
        $region24: #{tpu_custom_call.1} parent=11 // pred_fallthru
          _
        // Predicated region
        $region25: #{tpu_custom_call.1} parent=11 // pred_check
          %p314 = pneg %p159
        $region26: #{tpu_custom_call.1} parent=11 // pred_check_branch
          %316 = sbr.rel (%p314) target = $region28
        $region27: #{tpu_custom_call.1} parent=11 // pred_region
          _
        $region28: #{tpu_custom_call.1} parent=11 // pred_fallthru
          _
        // Predicated region
        $region29: #{tpu_custom_call.1} parent=11 // pred_check
          %p317 = pneg %p180
        $region30: #{tpu_custom_call.1} parent=11 // pred_check_branch
          %319 = sbr.rel (%p317) target = $region32
        $region31: #{tpu_custom_call.1} parent=11 // pred_region
          _
        $region32: #{tpu_custom_call.1} parent=11 // pred_fallthru
          _
        // Predicated region
        $region33: #{tpu_custom_call.1} parent=11 // pred_check
          %p320 = pneg %p201
        $region34: #{tpu_custom_call.1} parent=11 // pred_check_branch
          %322 = sbr.rel (%p320) target = $region36
        $region35: #{tpu_custom_call.1} parent=11 // pred_region
          _
        $region36: #{tpu_custom_call.1} parent=11 // pred_fallthru
          _
        // Predicated region
        $region37: #{tpu_custom_call.1} parent=11 // pred_check
          %p323 = pneg %p222
        $region38: #{tpu_custom_call.1} parent=11 // pred_check_branch
          %325 = sbr.rel (%p323) target = $region40
        $region39: #{tpu_custom_call.1} parent=11 // pred_region
          _
        $region40: #{tpu_custom_call.1} parent=11 // pred_fallthru
          _
        // Predicated region
        $region41: #{tpu_custom_call.1} parent=11 // pred_check
          %p326 = pneg %p243
        $region42: #{tpu_custom_call.1} parent=11 // pred_check_branch
          %328 = sbr.rel (%p326) target = $region44
        $region43: #{tpu_custom_call.1} parent=11 // pred_region
          _
        $region44: #{tpu_custom_call.1} parent=11 // pred_fallthru
          _
        // Predicated region
        $region45: #{tpu_custom_call.1} parent=11 // pred_check
          %p329 = pneg %p264
        $region46: #{tpu_custom_call.1} parent=11 // pred_check_branch
          %331 = sbr.rel (%p329) target = $region48
        $region47: #{tpu_custom_call.1} parent=11 // pred_region
          _
        $region48: #{tpu_custom_call.1} parent=11 // pred_fallthru
          _
      $region12: #{tpu_custom_call.1} parent=5 // pred_fallthru
        _
      %p332 = scmp.lt.s32.totalorder %s23, 4
      // Predicated region
      $region49: #{tpu_custom_call.1} parent=5 // pred_check
        %p333 = pneg %p332
      $region50: #{tpu_custom_call.1} parent=5 // pred_check_branch
        %335 = sbr.rel (%p333) target = $region52
      $region51: #{tpu_custom_call.1} parent=5 // pred_region
        // Predicated region
        $region53: #{tpu_custom_call.1} parent=51 // pred_check
          %p336 = pneg %p43
        $region54: #{tpu_custom_call.1} parent=51 // pred_check_branch
          %338 = sbr.rel (%p336) target = $region56
        $region55: #{tpu_custom_call.1} parent=51 // pred_region
          %p339 = scmp.lt.s32.totalorder %s23, 3
          %s340 = scalar_select %p339, %s23, 3
          %s341 = smul.addr %s340, 2
          %s342 = scalar_lea.vmem %s0, %s341
        $region56: #{tpu_custom_call.1} parent=51 // pred_fallthru
          _
        // Predicated region
        $region57: #{tpu_custom_call.1} parent=51 // pred_check
          %p343 = pneg %p69
        $region58: #{tpu_custom_call.1} parent=51 // pred_check_branch
          %345 = sbr.rel (%p343) target = $region60
        $region59: #{tpu_custom_call.1} parent=51 // pred_region
          %s346 = sand.u32 %s59, 1
          %s347 = scalar_lea.sflag [#allocation3], %s346
          %s348 = sand.u32 %s59, 1
          %s349 = smul.addr %s348, 4
          %s350 = scalar_lea.vmem [#allocation2], %s349
          %s352 = ssub.s32 64, 64
          %353 = vsyncadd %s347, %s352
          %s354 = smul.addr %s23, 2
          %s355 = smul.addr %s354, 32
          %s356 = scalar_lea.hbm %s1, %s355
          %s358 = sshll.u32 %s350, 4
          %s359 = int_to_ptr.vmem [resolvable:$true] %s358
          %361 = dma.hbm_to_vmem [thread:$0]  %s356, 64, %s359, %s347
        $region60: #{tpu_custom_call.1} parent=51 // pred_fallthru
          _
      $region52: #{tpu_custom_call.1} parent=5 // pred_fallthru
        _
      %p362 = scmp.le.s32.totalorder 1, %s23
      %p363 = scmp.lt.s32.totalorder %s23, 5
      %p364 = pnand %p362, %p363
      %p365 = pneg %p364
      // Predicated region
      $region61: #{tpu_custom_call.1} parent=5 // pred_check
        _
      $region62: #{tpu_custom_call.1} parent=5 // pred_check_branch
        %367 = sbr.rel (%p364) target = $region64
      $region63: #{tpu_custom_call.1} parent=5 // pred_region
        %s368 = ssub.s32 %s23, 1
        %s369 = sand.u32 %s62, 1
        %s370 = scalar_lea.sflag [#allocation3], %s369
        %s371 = sand.u32 %s62, 1
        %s372 = smul.addr %s371, 4
        %s373 = scalar_lea.vmem [#allocation2], %s372
        // Predicated region
        $region65: #{tpu_custom_call.1} parent=63 // pred_check
          %p374 = pneg %p75
        $region66: #{tpu_custom_call.1} parent=63 // pred_check_branch
          %376 = sbr.rel (%p374) target = $region68
        $region67: #{tpu_custom_call.1} parent=63 // pred_region
          %377 = dma.done %s370, 64
        $region68: #{tpu_custom_call.1} parent=63 // pred_fallthru
          _
        %p378 = scmp.lt.s32.totalorder %s28, 3
        %s379 = scalar_select %p378, %s28, 3
        %s380 = smul.addr %s379, 2
        %s381 = scalar_lea.vmem %s0, %s380
        %p382 = pneg %p49
        %p383 = pneg %p46
        %s384 = sand.u32 %s62, 1
        %s385 = scalar_lea.sflag [#allocation3], %s384
        %s386 = sand.u32 %s62, 1
        %s387 = smul.addr %s386, 4
        %s388 = scalar_lea.vmem [#allocation2], %s387
        %p389 = pneg %p75
        %p390 = pneg %p72
        %p391 = pneg %p96
        %p392 = pneg %p93
        %p393 = pneg %p117
        %p394 = pneg %p114
        %p395 = pneg %p138
        %p396 = pneg %p135
        %p397 = pneg %p159
        %p398 = pneg %p156
        %p399 = pneg %p180
        %p400 = pneg %p177
        %p401 = pneg %p201
        %p402 = pneg %p198
        %p403 = pneg %p222
        %p404 = pneg %p219
        %p405 = pneg %p243
        %p406 = pneg %p240
        %p407 = pneg %p264
        %p408 = pneg %p261
        %p409 = pneg %p290
        %p410 = pneg %p287
        %s411 = sand.u32 %s277, 1
        %s412 = scalar_lea.sflag [#allocation4], %s411
        %s413 = sand.u32 %s277, 1
        %s414 = smul.addr %s413, 16
        %s415 = scalar_lea.vmem [#allocation5], %s414
        %p416 = scmp.lt.s32.totalorder %s28, 3
        %s417 = scalar_select %p416, %s28, 3
        %s418 = smul.addr %s417, 2
        %s419 = scalar_lea.vmem %s0, %s418
        %v421 = vld [vmem:[%s2] sm:$0x3]
        %v422 = vld [vmem:[%s3] sm:$0xf]
        %v423 = vld [vmem:[%s4] sm:$0x3]
        %v424 = vld [vmem:[%s5] sm:$0xf]
        %v425 = vld [vmem:[%s6] sm:$0x3]
        %v426 = vld [vmem:[%s7] sm:$0xf]
        %v427 = vld [vmem:[%s8] sm:$0xf]
        %v428 = vld [vmem:[%s9] sm:$0xf]
        %v429 = vld [vmem:[%s10] sm:$0xff]
        %v430 = vld [vmem:[%s419] sm:$0x3]
        %v431 = vld [vmem:[%s373] sm:$0xf]
        %433 = vset.pattern.permute.xlu0 0
        %434 = vperm.xlu0 %433, %v422
        %v435 = vpop.permute.xlu0 %434
        %v439 = vunpack.c.l.s4 1983009808
        %v440 = vunpack.c.0.s8 %v439
        %v441 = vlaneseq
        %v442 = vshrl.u32 %v441, 7
        %v443 = vsub.s32 %v440, %v442
        %v444 = vrot.slane %v431, %v443
        %v445 = vcombine.high %v444, %v444
        %vm446 = vcmask 31744
        %v448 = vsel %vm446, %v421, 0
        %vm450 = vcmask 1041408
        %v452 = vsel %vm450, %v444, 0
        %v455 = vsel %vm450, %v445, 0
        %457 = vmatprep.subr.bf16.mxu0 %v455
        %458 = vmatpush1.bf16.msra.mxu0 %v452
        %459 = vmatprep.subr.bf16.mxu0 0
        %460 = vmatpush1.bf16.msra.mxu0 0
        %461 = vmatprep.subr.bf16.mxu0 0
        %462 = vmatpush1.bf16.msra.mxu0 0
        %463 = vmatprep.subr.bf16.mxu0 0
        %464 = vmatpush1.bf16.msra.mxu0 0
        %465 = vmatprep.subr.bf16.mxu0 0
        %466 = vmatpush1.bf16.msra.mxu0 0
        %467 = vmatprep.subr.bf16.mxu0 0
        %468 = vmatpush1.bf16.msra.mxu0 0
        %469 = vmatprep.subr.bf16.mxu0 0
        %470 = vmatpush1.bf16.msra.mxu0 0
        %471 = vmatprep.subr.bf16.mxu0 0
        %472 = vmatpush1.bf16.msra.mxu0 0
        %473 = vmatprep.subr.bf16.mxu0 0
        %474 = vmatpush1.bf16.msra.mxu0 0
        %475 = vmatprep.subr.bf16.mxu0 0
        %476 = vmatpush1.bf16.msra.mxu0 0
        %477 = vmatprep.subr.bf16.mxu0 0
        %478 = vmatpush1.bf16.msra.mxu0 0
        %479 = vmatprep.subr.bf16.mxu0 0
        %480 = vmatpush1.bf16.msra.mxu0 0
        %481 = vmatprep.subr.bf16.mxu0 0
        %482 = vmatpush1.bf16.msra.mxu0 0
        %483 = vmatprep.subr.bf16.mxu0 0
        %484 = vmatpush1.bf16.msra.mxu0 0
        %485 = vmatprep.subr.bf16.mxu0 0
        %486 = vmatpush1.bf16.msra.mxu0 0
        %487 = vmatprep.subr.bf16.mxu0 0
        %488 = vmatpush1.bf16.msra.mxu0 0
        %489 = vmatprep.mubr.bf16.mxu0 0
        %490 = vmatmul.mubr.bf16.gmra.mrb[0].mxu0 %v448
        %v491 = vpop.f32.mrb[0].mxu0
        %v492 = vadd.f32 %v435, %v491
        %v493 = vpop.f32.mrb[0].mxu0
        %v494 = vadd.f32 %v435, %v493
        %v495 = vpop.f32.mrb[0].mxu0
        %v496 = vpop.f32.mrb[0].mxu0
        %497 = vdwg.mxu0
        %499 = vset.pattern.permute.xlu0 0
        %500 = vperm.xlu0 %499, %v424
        %v501 = vpop.permute.xlu0 %500
        %v504 = vsel %vm446, %v423, 0
        %v507 = vsel %vm450, %v430, 0
        %509 = vmatprep.subr.bf16.mxu0 0
        %510 = vmatpush1.bf16.msra.mxu0 %v507
        %511 = vmatprep.subr.bf16.mxu0 0
        %512 = vmatpush1.bf16.msra.mxu0 0
        %513 = vmatprep.subr.bf16.mxu0 0
        %514 = vmatpush1.bf16.msra.mxu0 0
        %515 = vmatprep.subr.bf16.mxu0 0
        %516 = vmatpush1.bf16.msra.mxu0 0
        %517 = vmatprep.subr.bf16.mxu0 0
        %518 = vmatpush1.bf16.msra.mxu0 0
        %519 = vmatprep.subr.bf16.mxu0 0
        %520 = vmatpush1.bf16.msra.mxu0 0
        %521 = vmatprep.subr.bf16.mxu0 0
        %522 = vmatpush1.bf16.msra.mxu0 0
        %523 = vmatprep.subr.bf16.mxu0 0
        %524 = vmatpush1.bf16.msra.mxu0 0
        %525 = vmatprep.subr.bf16.mxu0 0
        %526 = vmatpush1.bf16.msra.mxu0 0
        %527 = vmatprep.subr.bf16.mxu0 0
        %528 = vmatpush1.bf16.msra.mxu0 0
        %529 = vmatprep.subr.bf16.mxu0 0
        %530 = vmatpush1.bf16.msra.mxu0 0
        %531 = vmatprep.subr.bf16.mxu0 0
        %532 = vmatpush1.bf16.msra.mxu0 0
        %533 = vmatprep.subr.bf16.mxu0 0
        %534 = vmatpush1.bf16.msra.mxu0 0
        %535 = vmatprep.subr.bf16.mxu0 0
        %536 = vmatpush1.bf16.msra.mxu0 0
        %537 = vmatprep.subr.bf16.mxu0 0
        %538 = vmatpush1.bf16.msra.mxu0 0
        %539 = vmatprep.subr.bf16.mxu0 0
        %540 = vmatpush1.bf16.msra.mxu0 0
        %541 = vmatprep.mubr.bf16.mxu0 0
        %542 = vmatmul.mubr.bf16.gmra.mrb[0].mxu0 %v504
        %v543 = vpop.f32.mrb[0].mxu0
        %v544 = vadd.f32 %v501, %v543
        %v545 = vpop.f32.mrb[0].mxu0
        %v546 = vpop.f32.mrb[0].mxu0
        %v547 = vpop.f32.mrb[0].mxu0
        %548 = vdwg.mxu0
        %550 = vset.pattern.permute.xlu0 0
        %551 = vperm.xlu0 %550, %v426
        %v552 = vpop.permute.xlu0 %551
        %v555 = vsel %vm446, %v425, 0
        %557 = vmatprep.subr.bf16.mxu0 %v455
        %558 = vmatpush1.bf16.msra.mxu0 %v452
        %559 = vmatprep.subr.bf16.mxu0 0
        %560 = vmatpush1.bf16.msra.mxu0 0
        %561 = vmatprep.subr.bf16.mxu0 0
        %562 = vmatpush1.bf16.msra.mxu0 0
        %563 = vmatprep.subr.bf16.mxu0 0
        %564 = vmatpush1.bf16.msra.mxu0 0
        %565 = vmatprep.subr.bf16.mxu0 0
        %566 = vmatpush1.bf16.msra.mxu0 0
        %567 = vmatprep.subr.bf16.mxu0 0
        %568 = vmatpush1.bf16.msra.mxu0 0
        %569 = vmatprep.subr.bf16.mxu0 0
        %570 = vmatpush1.bf16.msra.mxu0 0
        %571 = vmatprep.subr.bf16.mxu0 0
        %572 = vmatpush1.bf16.msra.mxu0 0
        %573 = vmatprep.subr.bf16.mxu0 0
        %574 = vmatpush1.bf16.msra.mxu0 0
        %575 = vmatprep.subr.bf16.mxu0 0
        %576 = vmatpush1.bf16.msra.mxu0 0
        %577 = vmatprep.subr.bf16.mxu0 0
        %578 = vmatpush1.bf16.msra.mxu0 0
        %579 = vmatprep.subr.bf16.mxu0 0
        %580 = vmatpush1.bf16.msra.mxu0 0
        %581 = vmatprep.subr.bf16.mxu0 0
        %582 = vmatpush1.bf16.msra.mxu0 0
        %583 = vmatprep.subr.bf16.mxu0 0
        %584 = vmatpush1.bf16.msra.mxu0 0
        %585 = vmatprep.subr.bf16.mxu0 0
        %586 = vmatpush1.bf16.msra.mxu0 0
        %587 = vmatprep.subr.bf16.mxu0 0
        %588 = vmatpush1.bf16.msra.mxu0 0
        %589 = vmatprep.mubr.bf16.mxu0 0
        %590 = vmatmul.mubr.bf16.gmra.mrb[0].mxu0 %v555
        %v591 = vpop.f32.mrb[0].mxu0
        %v592 = vadd.f32 %v552, %v591
        %v593 = vpop.f32.mrb[0].mxu0
        %v594 = vadd.f32 %v552, %v593
        %v595 = vpop.f32.mrb[0].mxu0
        %v596 = vpop.f32.mrb[0].mxu0
        %597 = vdwg.mxu0
        %v598 = vmax.f32 %v592, 0.0
        %v599 = vmax.f32 %v594, 0.0
        %600 = vmatprep.subr.bf16.mxu0 0
        %601 = vmatpush1.bf16.msra.mxu0 %v507
        %602 = vmatprep.subr.bf16.mxu0 0
        %603 = vmatpush1.bf16.msra.mxu0 0
        %604 = vmatprep.subr.bf16.mxu0 0
        %605 = vmatpush1.bf16.msra.mxu0 0
        %606 = vmatprep.subr.bf16.mxu0 0
        %607 = vmatpush1.bf16.msra.mxu0 0
        %608 = vmatprep.subr.bf16.mxu0 0
        %609 = vmatpush1.bf16.msra.mxu0 0
        %610 = vmatprep.subr.bf16.mxu0 0
        %611 = vmatpush1.bf16.msra.mxu0 0
        %612 = vmatprep.subr.bf16.mxu0 0
        %613 = vmatpush1.bf16.msra.mxu0 0
        %614 = vmatprep.subr.bf16.mxu0 0
        %615 = vmatpush1.bf16.msra.mxu0 0
        %616 = vmatprep.subr.bf16.mxu0 0
        %617 = vmatpush1.bf16.msra.mxu0 0
        %618 = vmatprep.subr.bf16.mxu0 0
        %619 = vmatpush1.bf16.msra.mxu0 0
        %620 = vmatprep.subr.bf16.mxu0 0
        %621 = vmatpush1.bf16.msra.mxu0 0
        %622 = vmatprep.subr.bf16.mxu0 0
        %623 = vmatpush1.bf16.msra.mxu0 0
        %624 = vmatprep.subr.bf16.mxu0 0
        %625 = vmatpush1.bf16.msra.mxu0 0
        %626 = vmatprep.subr.bf16.mxu0 0
        %627 = vmatpush1.bf16.msra.mxu0 0
        %628 = vmatprep.subr.bf16.mxu0 0
        %629 = vmatpush1.bf16.msra.mxu0 0
        %630 = vmatprep.subr.bf16.mxu0 0
        %631 = vmatpush1.bf16.msra.mxu0 0
        %632 = vmatprep.mubr.bf16.mxu0 0
        %633 = vmatmul.mubr.bf16.gmra.mrb[0].mxu0 %v555
        %v634 = vpop.f32.mrb[0].mxu0
        %v635 = vadd.f32 %v552, %v634
        %v636 = vpop.f32.mrb[0].mxu0
        %v637 = vpop.f32.mrb[0].mxu0
        %v638 = vpop.f32.mrb[0].mxu0
        %639 = vdwg.mxu0
        %v640 = vmax.f32 %v635, 0.0
        %v641 = vpack.c.bf16 %v544, %v544
        %v642 = vpack.c.bf16 %v492, %v492
        %v643 = vpack.c.bf16 %v494, %v494
        %644 = vxpose.xlu0.c.b16.start [1/8] %v641, 128
        %645 = vxpose.xlu0.c.b16.cont [2/8] 0, 128
        %646 = vxpose.xlu0.c.b16.cont [3/8] 0, 128
        %647 = vxpose.xlu0.c.b16.cont [4/8] 0, 128
        %648 = vxpose.xlu0.c.b16.cont [5/8] 0, 128
        %649 = vxpose.xlu0.c.b16.cont [6/8] 0, 128
        %650 = vxpose.xlu0.c.b16.cont [7/8] 0, 128
        %651 = vxpose.xlu0.c.b16.end [8/8] 0, 128
        %v652 = vpop.trf.xlu0
        %v653 = vpop.trf.xlu0
        %v654 = vpop.trf.xlu0
        %v655 = vpop.trf.xlu0
        %v656 = vpop.trf.xlu0
        %v657 = vpop.trf.xlu0
        %v658 = vpop.trf.xlu0
        %v659 = vpop.trf.xlu0
        %v661 = vsel %vm446, %v652, 0
        %v664 = vsel %vm446, %v653, 0
        %v667 = vsel %vm446, %v654, 0
        %v670 = vsel %vm446, %v655, 0
        %v673 = vsel %vm450, %v642, 0
        %v676 = vsel %vm450, %v643, 0
        %678 = vmatprep.subr.bf16.mxu0 %v676
        %679 = vmatpush1.bf16.msra.mxu0 %v673
        %680 = vmatprep.subr.bf16.mxu0 0
        %681 = vmatpush1.bf16.msra.mxu0 0
        %682 = vmatprep.subr.bf16.mxu0 0
        %683 = vmatpush1.bf16.msra.mxu0 0
        %684 = vmatprep.subr.bf16.mxu0 0
        %685 = vmatpush1.bf16.msra.mxu0 0
        %686 = vmatprep.subr.bf16.mxu0 0
        %687 = vmatpush1.bf16.msra.mxu0 0
        %688 = vmatprep.subr.bf16.mxu0 0
        %689 = vmatpush1.bf16.msra.mxu0 0
        %690 = vmatprep.subr.bf16.mxu0 0
        %691 = vmatpush1.bf16.msra.mxu0 0
        %692 = vmatprep.subr.bf16.mxu0 0
        %693 = vmatpush1.bf16.msra.mxu0 0
        %694 = vmatprep.subr.bf16.mxu0 0
        %695 = vmatpush1.bf16.msra.mxu0 0
        %696 = vmatprep.subr.bf16.mxu0 0
        %697 = vmatpush1.bf16.msra.mxu0 0
        %698 = vmatprep.subr.bf16.mxu0 0
        %699 = vmatpush1.bf16.msra.mxu0 0
        %700 = vmatprep.subr.bf16.mxu0 0
        %701 = vmatpush1.bf16.msra.mxu0 0
        %702 = vmatprep.subr.bf16.mxu0 0
        %703 = vmatpush1.bf16.msra.mxu0 0
        %704 = vmatprep.subr.bf16.mxu0 0
        %705 = vmatpush1.bf16.msra.mxu0 0
        %706 = vmatprep.subr.bf16.mxu0 0
        %707 = vmatpush1.bf16.msra.mxu0 0
        %708 = vmatprep.subr.bf16.mxu0 0
        %709 = vmatpush1.bf16.msra.mxu0 0
        %710 = vmatprep.mubr.bf16.mxu0 0
        %711 = vmatmul.mubr.bf16.gmra.mrb[0].mxu0 %v661
        %v712 = vpop.f32.mrb[0].mxu0
        %v713 = vadd.f32 0.0, %v712
        %v714 = vpop.f32.mrb[0].mxu0
        %v715 = vadd.f32 0.0, %v714
        %v716 = vpop.f32.mrb[0].mxu0
        %v717 = vadd.f32 0.0, %v716
        %v718 = vpop.f32.mrb[0].mxu0
        %v719 = vadd.f32 0.0, %v718
        %720 = vmatprep.mubr.bf16.mxu0 0
        %721 = vmatmul.mubr.bf16.gmra.mrb[0].mxu0 %v664
        %v722 = vpop.f32.mrb[0].mxu0
        %v723 = vadd.f32 0.0, %v722
        %v724 = vpop.f32.mrb[0].mxu0
        %v725 = vadd.f32 0.0, %v724
        %v726 = vpop.f32.mrb[0].mxu0
        %v727 = vadd.f32 0.0, %v726
        %v728 = vpop.f32.mrb[0].mxu0
        %v729 = vadd.f32 0.0, %v728
        %730 = vmatprep.mubr.bf16.mxu0 0
        %731 = vmatmul.mubr.bf16.gmra.mrb[0].mxu0 %v667
        %v732 = vpop.f32.mrb[0].mxu0
        %v733 = vadd.f32 0.0, %v732
        %v734 = vpop.f32.mrb[0].mxu0
        %v735 = vadd.f32 0.0, %v734
        %v736 = vpop.f32.mrb[0].mxu0
        %v737 = vadd.f32 0.0, %v736
        %v738 = vpop.f32.mrb[0].mxu0
        %v739 = vadd.f32 0.0, %v738
        %740 = vmatprep.mubr.bf16.mxu0 0
        %741 = vmatmul.mubr.bf16.gmra.mrb[0].mxu0 %v670
        %v742 = vpop.f32.mrb[0].mxu0
        %v743 = vadd.f32 0.0, %v742
        %v744 = vpop.f32.mrb[0].mxu0
        %v745 = vadd.f32 0.0, %v744
        %v746 = vpop.f32.mrb[0].mxu0
        %v747 = vadd.f32 0.0, %v746
        %v748 = vpop.f32.mrb[0].mxu0
        %v749 = vadd.f32 0.0, %v748
        %750 = vdwg.mxu0
        %v751 = vmax.f32 %v713, %v723
        %v752 = vmax.f32 %v717, %v727
        %v753 = vmax.f32 %v751, %v733
        %v754 = vmax.f32 %v752, %v737
        %v755 = vmax.f32 %v753, %v743
        %v756 = vmax.f32 %v754, %v747
        %v757 = vmax.f32 %v755, %v756
        %v758 = vrot.slane %v757, 4
        %v759 = vmax.f32 %v757, %v758
        %v760 = vrot.slane %v759, 2
        %v761 = vmax.f32 %v759, %v760
        %v762 = vrot.slane %v761, 1
        %v763 = vmax.f32 %v761, %v762
        %v764 = vmax.f32 %v715, %v725
        %v765 = vmax.f32 %v719, %v729
        %v766 = vmax.f32 %v764, %v735
        %v767 = vmax.f32 %v765, %v739
        %v768 = vmax.f32 %v766, %v745
        %v769 = vmax.f32 %v767, %v749
        %v770 = vmax.f32 %v768, %v769
        %v771 = vrot.slane %v770, 4
        %v772 = vmax.f32 %v770, %v771
        %v773 = vrot.slane %v772, 2
        %v774 = vmax.f32 %v772, %v773
        %v775 = vrot.slane %v774, 1
        %v776 = vmax.f32 %v774, %v775
        %v777 = vsub.f32 %v713, %v763
        %v778 = vsub.f32 %v715, %v776
        %v779 = vsub.f32 %v717, %v763
        %v780 = vsub.f32 %v719, %v776
        %v781 = vsub.f32 %v723, %v763
        %v782 = vsub.f32 %v725, %v776
        %v783 = vsub.f32 %v727, %v763
        %v784 = vsub.f32 %v729, %v776
        %v785 = vsub.f32 %v733, %v763
        %v786 = vsub.f32 %v735, %v776
        %v787 = vsub.f32 %v737, %v763
        %v788 = vsub.f32 %v739, %v776
        %v789 = vsub.f32 %v743, %v763
        %v790 = vsub.f32 %v745, %v776
        %v791 = vsub.f32 %v747, %v763
        %v792 = vsub.f32 %v749, %v776
        %v793 = vmul.f32 %v777, 1.442695
        %v794 = vpow.pop %v793
        %v795 = vmul.f32 %v778, 1.442695
        %v796 = vpow.pop %v795
        %v797 = vmul.f32 %v779, 1.442695
        %v798 = vpow.pop %v797
        %v799 = vmul.f32 %v780, 1.442695
        %v800 = vpow.pop %v799
        %v801 = vmul.f32 %v781, 1.442695
        %v802 = vpow.pop %v801
        %v803 = vmul.f32 %v782, 1.442695
        %v804 = vpow.pop %v803
        %v805 = vmul.f32 %v783, 1.442695
        %v806 = vpow.pop %v805
        %v807 = vmul.f32 %v784, 1.442695
        %v808 = vpow.pop %v807
        %v809 = vmul.f32 %v785, 1.442695
        %v810 = vpow.pop %v809
        %v811 = vmul.f32 %v786, 1.442695
        %v812 = vpow.pop %v811
        %v813 = vmul.f32 %v787, 1.442695
        %v814 = vpow.pop %v813
        %v815 = vmul.f32 %v788, 1.442695
        %v816 = vpow.pop %v815
        %v817 = vmul.f32 %v789, 1.442695
        %v818 = vpow.pop %v817
        %v819 = vmul.f32 %v790, 1.442695
        %v820 = vpow.pop %v819
        %v821 = vmul.f32 %v791, 1.442695
        %v822 = vpow.pop %v821
        %v823 = vmul.f32 %v792, 1.442695
        %v824 = vpow.pop %v823
        %v825 = vadd.f32 %v794, %v798
        %v826 = vadd.f32 %v825, %v802
        %v827 = vadd.f32 %v826, %v806
        %v828 = vadd.f32 %v827, %v810
        %v829 = vadd.f32 %v828, %v814
        %v830 = vadd.f32 %v829, %v818
        %v831 = vadd.f32 %v830, %v822
        %v832 = vrot.slane %v831, 4
        %v833 = vadd.f32 %v831, %v832
        %v834 = vrot.slane %v833, 2
        %v835 = vadd.f32 %v833, %v834
        %v836 = vrot.slane %v835, 1
        %v837 = vadd.f32 %v835, %v836
        %v838 = vadd.f32 %v796, %v800
        %v839 = vadd.f32 %v838, %v804
        %v840 = vadd.f32 %v839, %v808
        %v841 = vadd.f32 %v840, %v812
        %v842 = vadd.f32 %v841, %v816
        %v843 = vadd.f32 %v842, %v820
        %v844 = vadd.f32 %v843, %v824
        %v845 = vrot.slane %v844, 4
        %v846 = vadd.f32 %v844, %v845
        %v847 = vrot.slane %v846, 2
        %v848 = vadd.f32 %v846, %v847
        %v849 = vrot.slane %v848, 1
        %v850 = vadd.f32 %v848, %v849
        %v851 = vrcp.pop %v837
        %v852 = vrcp.pop %v850
        %v853 = vpack.c.bf16 %v640, %v640
        %v854 = vpack.c.bf16 %v798, %v794
        %v855 = vpack.c.bf16 %v800, %v796
        %v856 = vpack.c.bf16 %v806, %v802
        %v857 = vpack.c.bf16 %v808, %v804
        %v858 = vpack.c.bf16 %v814, %v810
        %v859 = vpack.c.bf16 %v816, %v812
        %v860 = vpack.c.bf16 %v822, %v818
        %v861 = vpack.c.bf16 %v824, %v820
        %vm862 = vcmask 523264
        %v864 = vsel %vm862, %v853, 0
        %866 = vmatprep.subr.bf16.mxu0 %v855
        %867 = vmatpush1.bf16.msra.mxu0 %v854
        %868 = vmatprep.subr.bf16.mxu0 %v857
        %869 = vmatpush1.bf16.msra.mxu0 %v856
        %870 = vmatprep.subr.bf16.mxu0 %v859
        %871 = vmatpush1.bf16.msra.mxu0 %v858
        %872 = vmatprep.subr.bf16.mxu0 %v861
        %873 = vmatpush1.bf16.msra.mxu0 %v860
        %874 = vmatprep.subr.bf16.mxu0 0
        %875 = vmatpush1.bf16.msra.mxu0 0
        %876 = vmatprep.subr.bf16.mxu0 0
        %877 = vmatpush1.bf16.msra.mxu0 0
        %878 = vmatprep.subr.bf16.mxu0 0
        %879 = vmatpush1.bf16.msra.mxu0 0
        %880 = vmatprep.subr.bf16.mxu0 0
        %881 = vmatpush1.bf16.msra.mxu0 0
        %882 = vmatprep.subr.bf16.mxu0 0
        %883 = vmatpush1.bf16.msra.mxu0 0
        %884 = vmatprep.subr.bf16.mxu0 0
        %885 = vmatpush1.bf16.msra.mxu0 0
        %886 = vmatprep.subr.bf16.mxu0 0
        %887 = vmatpush1.bf16.msra.mxu0 0
        %888 = vmatprep.subr.bf16.mxu0 0
        %889 = vmatpush1.bf16.msra.mxu0 0
        %890 = vmatprep.subr.bf16.mxu0 0
        %891 = vmatpush1.bf16.msra.mxu0 0
        %892 = vmatprep.subr.bf16.mxu0 0
        %893 = vmatpush1.bf16.msra.mxu0 0
        %894 = vmatprep.subr.bf16.mxu0 0
        %895 = vmatpush1.bf16.msra.mxu0 0
        %896 = vmatprep.subr.bf16.mxu0 0
        %897 = vmatpush1.bf16.msra.mxu0 0
        %898 = vmatprep.mubr.bf16.mxu0 0
        %899 = vmatmul.mubr.bf16.gmra.mrb[0].mxu0 %v864
        %v900 = vpop.f32.mrb[0].mxu0
        %v901 = vadd.f32 0.0, %v900
        %v902 = vpop.f32.mrb[0].mxu0
        %v903 = vadd.f32 0.0, %v902
        %v904 = vpop.f32.mrb[0].mxu0
        %v905 = vpop.f32.mrb[0].mxu0
        %906 = vdwg.mxu0
        %v907 = vpack.c.bf16 %v901, %v901
        %v908 = vpack.c.bf16 %v903, %v903
        %v910 = vsel %vm446, %v427, 0
        %v913 = vsel %vm450, %v907, 0
        %v916 = vsel %vm450, %v908, 0
        %918 = vmatprep.subr.bf16.mxu0 %v916
        %919 = vmatpush1.bf16.msra.mxu0 %v913
        %920 = vmatprep.subr.bf16.mxu0 0
        %921 = vmatpush1.bf16.msra.mxu0 0
        %922 = vmatprep.subr.bf16.mxu0 0
        %923 = vmatpush1.bf16.msra.mxu0 0
        %924 = vmatprep.subr.bf16.mxu0 0
        %925 = vmatpush1.bf16.msra.mxu0 0
        %926 = vmatprep.subr.bf16.mxu0 0
        %927 = vmatpush1.bf16.msra.mxu0 0
        %928 = vmatprep.subr.bf16.mxu0 0
        %929 = vmatpush1.bf16.msra.mxu0 0
        %930 = vmatprep.subr.bf16.mxu0 0
        %931 = vmatpush1.bf16.msra.mxu0 0
        %932 = vmatprep.subr.bf16.mxu0 0
        %933 = vmatpush1.bf16.msra.mxu0 0
        %934 = vmatprep.subr.bf16.mxu0 0
        %935 = vmatpush1.bf16.msra.mxu0 0
        %936 = vmatprep.subr.bf16.mxu0 0
        %937 = vmatpush1.bf16.msra.mxu0 0
        %938 = vmatprep.subr.bf16.mxu0 0
        %939 = vmatpush1.bf16.msra.mxu0 0
        %940 = vmatprep.subr.bf16.mxu0 0
        %941 = vmatpush1.bf16.msra.mxu0 0
        %942 = vmatprep.subr.bf16.mxu0 0
        %943 = vmatpush1.bf16.msra.mxu0 0
        %944 = vmatprep.subr.bf16.mxu0 0
        %945 = vmatpush1.bf16.msra.mxu0 0
        %946 = vmatprep.subr.bf16.mxu0 0
        %947 = vmatpush1.bf16.msra.mxu0 0
        %948 = vmatprep.subr.bf16.mxu0 0
        %949 = vmatpush1.bf16.msra.mxu0 0
        %950 = vmatprep.mubr.bf16.mxu0 0
        %951 = vmatmul.mubr.bf16.gmra.mrb[0].mxu0 %v910
        %v952 = vpop.f32.mrb[0].mxu0
        %v953 = vadd.f32 0.0, %v952
        %v954 = vpop.f32.mrb[0].mxu0
        %v955 = vadd.f32 0.0, %v954
        %v956 = vpop.f32.mrb[0].mxu0
        %v957 = vpop.f32.mrb[0].mxu0
        %958 = vdwg.mxu0
        %v959 = vmul.f32 %v953, %v851
        %v960 = vmul.f32 %v955, %v852
        %v961 = vpack.c.bf16 %v598, %v598
        %v962 = vpack.c.bf16 %v599, %v599
        %v964 = vsel %vm446, %v428, 0
        %v967 = vsel %vm450, %v961, 0
        %v970 = vsel %vm450, %v962, 0
        %972 = vmatprep.subr.bf16.mxu0 %v970
        %973 = vmatpush1.bf16.msra.mxu0 %v967
        %974 = vmatprep.subr.bf16.mxu0 0
        %975 = vmatpush1.bf16.msra.mxu0 0
        %976 = vmatprep.subr.bf16.mxu0 0
        %977 = vmatpush1.bf16.msra.mxu0 0
        %978 = vmatprep.subr.bf16.mxu0 0
        %979 = vmatpush1.bf16.msra.mxu0 0
        %980 = vmatprep.subr.bf16.mxu0 0
        %981 = vmatpush1.bf16.msra.mxu0 0
        %982 = vmatprep.subr.bf16.mxu0 0
        %983 = vmatpush1.bf16.msra.mxu0 0
        %984 = vmatprep.subr.bf16.mxu0 0
        %985 = vmatpush1.bf16.msra.mxu0 0
        %986 = vmatprep.subr.bf16.mxu0 0
        %987 = vmatpush1.bf16.msra.mxu0 0
        %988 = vmatprep.subr.bf16.mxu0 0
        %989 = vmatpush1.bf16.msra.mxu0 0
        %990 = vmatprep.subr.bf16.mxu0 0
        %991 = vmatpush1.bf16.msra.mxu0 0
        %992 = vmatprep.subr.bf16.mxu0 0
        %993 = vmatpush1.bf16.msra.mxu0 0
        %994 = vmatprep.subr.bf16.mxu0 0
        %995 = vmatpush1.bf16.msra.mxu0 0
        %996 = vmatprep.subr.bf16.mxu0 0
        %997 = vmatpush1.bf16.msra.mxu0 0
        %998 = vmatprep.subr.bf16.mxu0 0
        %999 = vmatpush1.bf16.msra.mxu0 0
        %1000 = vmatprep.subr.bf16.mxu0 0
        %1001 = vmatpush1.bf16.msra.mxu0 0
        %1002 = vmatprep.subr.bf16.mxu0 0
        %1003 = vmatpush1.bf16.msra.mxu0 0
        %1004 = vmatprep.mubr.bf16.mxu0 0
        %1005 = vmatmul.mubr.bf16.gmra.mrb[0].mxu0 %v964
        %v1006 = vpop.f32.mrb[0].mxu0
        %v1007 = vadd.f32 0.0, %v1006
        %v1008 = vpop.f32.mrb[0].mxu0
        %v1009 = vadd.f32 0.0, %v1008
        %v1010 = vpop.f32.mrb[0].mxu0
        %v1011 = vpop.f32.mrb[0].mxu0
        %1012 = vdwg.mxu0
        %v1013 = vadd.f32 %v959, %v1007
        %v1014 = vadd.f32 %v960, %v1009
        %1016 = vset.pattern.permute.xlu0 0
        %1017 = vperm.xlu0 %1016, %v429
        %v1018 = vpop.permute.xlu0 %1017
        %v1020 = vadd.f32 %v1013, %v1018
        %v1021 = vadd.f32 %v1014, %v1018
        %v1022 = vmax.f32 %v1020, 0.0
        %v1023 = vmax.f32 %v1021, 0.0
        %1024 = vst [vmem:[%s415] sm:$0xff] %v1022
        %1025 = vst [vmem:[%s415 + $0x8] sm:$0xff] %v1023
        %s1026 = sand.u32 %s277, 1
        %s1027 = scalar_lea.sflag [#allocation4], %s1026
        %s1028 = sand.u32 %s277, 1
        %s1029 = smul.addr %s1028, 16
        %s1030 = scalar_lea.vmem [#allocation5], %s1029
        // Predicated region
        $region69: #{tpu_custom_call.1} parent=63 // pred_check
          %p1031 = pneg %p287
        $region70: #{tpu_custom_call.1} parent=63 // pred_check_branch
          %1033 = sbr.rel (%p1031) target = $region72
        $region71: #{tpu_custom_call.1} parent=63 // pred_region
          %s1035 = ssub.s32 256, 256
          %1036 = vsyncadd %s1027, %s1035
          %s1037 = smul.addr %s28, 2
          %s1038 = smul.addr %s1037, 128
          %s1039 = scalar_lea.hbm %s11, %s1038
          %s1041 = sshll.u32 %s1030, 4
          %s1042 = int_to_ptr.vmem [resolvable:$true] %s1041
          %1044 = dma.vmem_to_hbm [thread:$0]  %s1042, 256, %s1039, %s1027
        $region72: #{tpu_custom_call.1} parent=63 // pred_fallthru
          _
      $region64: #{tpu_custom_call.1} parent=5 // pred_fallthru
        _
      %p1045 = scmp.le.s32.totalorder 2, %s23
      // Predicated region
      $region73: #{tpu_custom_call.1} parent=5 // pred_check
        %p1046 = pneg %p1045
      $region74: #{tpu_custom_call.1} parent=5 // pred_check_branch
        %1048 = sbr.rel (%p1046) target = $region76
      $region75: #{tpu_custom_call.1} parent=5 // pred_region
        %s1049 = ssub.s32 %s23, 2
        // Predicated region
        $region77: #{tpu_custom_call.1} parent=75 // pred_check
          %p1050 = pneg %p293
        $region78: #{tpu_custom_call.1} parent=75 // pred_check_branch
          %1052 = sbr.rel (%p1050) target = $region80
        $region79: #{tpu_custom_call.1} parent=75 // pred_region
          %s1053 = sand.u32 %s278, 1
          %s1054 = scalar_lea.sflag [#allocation4], %s1053
          %s1055 = sand.u32 %s278, 1
          %s1056 = smul.addr %s1055, 16
          %s1057 = scalar_lea.vmem [#allocation5], %s1056
          %1058 = dma.done %s1054, 256
        $region80: #{tpu_custom_call.1} parent=75 // pred_fallthru
          _
      $region76: #{tpu_custom_call.1} parent=5 // pred_fallthru
        _
    $region6: #{tpu_custom_call.1} parent=1 // loop_footer
      %s27 = sadd.s32 1, %s23
    $region7: #{tpu_custom_call.1} parent=1 // loop_footer_branch
      %22 = sbr.rel target = $region3
    $region8: #{tpu_custom_call.1} parent=1 // loop_exit
      _
    %1059 = vsyncpa [#allocation3], 1
    %s1060 = scalar_lea.sflag [#allocation3], 1
    %1061 = vsyncpa %s1060, 1
    %1062 = vsyncpa [#allocation4], 1
    %s1063 = scalar_lea.sflag [#allocation4], 1
    %1064 = vsyncpa %s1063, 1

</llo_original>
